<compile_context>
chip_gen: v7x
topology: tpu7x:2x2x1
jax: 0.10.0
libtpu: 0.0.40
codegen_flags: <defaults>
</compile_context>

<pallas_src>
import jax
import jax.numpy as jnp
from jax import lax
from jax.experimental import pallas as pl
from jax.experimental.pallas import tpu as pltpu


def _round_up(x, m):
    return (x + m - 1) // m * m


def mlp1_kernel(x_ref, w_in_ref, b_in_ref, w_fc_ref, b_fc_ref,
                w_out_ref, b_out_ref, o_ref):
    # Biases stay (1, hidden)/(1, n_pad): the per-use sublane broadcast is cheap VPU work
    # fully hidden under the MXU; materializing (bb, hidden) f32 copies spills vregs.
    b_in = b_in_ref[...]      # (1, hidden) f32
    b_fc = b_fc_ref[...]      # (1, hidden) f32
    b_out = b_out_ref[...]    # (1, n_pad)  f32

    # Input layer + ReLU (bf16 MXU matmul, f32 accumulation).
    h = jnp.dot(x_ref[...].astype(jnp.bfloat16), w_in_ref[...],
                preferred_element_type=jnp.float32)
    h = jnp.maximum(h + b_in, 0.0)

    # 5 iterations of the SAME fc1 layer (shared weights) + ReLU.
    # w_fc is read from its VMEM ref inside the (unrolled) body — no long-lived hoisted
    # value, so the 512 KiB bf16 weight never pressures the 64-vreg file.
    def body(_, h):
        z = jnp.dot(h.astype(jnp.bfloat16), w_fc_ref[...],
                    preferred_element_type=jnp.float32)
        return jnp.maximum(z + b_fc, 0.0)

    h = lax.fori_loop(0, 5, body, h, unroll=True)

    # Output layer + ReLU (output columns are zero-padded to a lane-dense 128 width).
    z = jnp.dot(h.astype(jnp.bfloat16), w_out_ref[...],
                preferred_element_type=jnp.float32)
    o_ref[...] = jnp.maximum(z + b_out, 0.0).astype(o_ref.dtype)


def prepare_mlp1_params(w_in, b_in, w_fc, b_fc, w_out, b_out):
    """One-time parameter preparation. Do NOT call per forward pass.

    Casts weights to bf16, reshapes biases to (1, h) f32, and zero-pads the output layer's
    columns up to a multiple of 128 so the kernel's output block is lane-dense (unmasked vst).
    Padded columns stay exactly 0 through ReLU and are sliced off in mlp1_forward.
    """
    hidden = w_in.shape[1]
    out_size = w_out.shape[1]
    n_pad = _round_up(out_size, 128)
    pad_cols = n_pad - out_size
    w_out_p = jnp.pad(w_out.astype(jnp.bfloat16), ((0, 0), (0, pad_cols)))
    b_out_p = jnp.pad(b_out.astype(jnp.float32).reshape(1, out_size),
                      ((0, 0), (0, pad_cols)))
    return (w_in.astype(jnp.bfloat16),
            b_in.astype(jnp.float32).reshape(1, hidden),
            w_fc.astype(jnp.bfloat16),
            b_fc.astype(jnp.float32).reshape(1, hidden),
            w_out_p,
            b_out_p)


def mlp1_forward(x, params, out_size, *, batch_block=512, out_dtype=jnp.float32):
    """Fused MLP1 forward. `params` must come from prepare_mlp1_params (bf16 / padded).

    out_dtype=jnp.bfloat16 halves the output writeback stream at large batch if the
    consumer accepts bf16; default f32 matches the PyTorch module.
    """
    w_in, b_in, w_fc, b_fc, w_out, b_out = params
    batch, in_size = x.shape
    hidden = w_in.shape[1]
    n_pad = w_out.shape[1]

    # Batch block: rows padded to a multiple of 8; once batch >= 16 the grid has >= 2
    # steps so dimension_semantics=("parallel",) shards blocks across both TensorCores
    # on v7x. Weights/biases stay VMEM-resident across grid steps (constant index maps).
    bb = min(batch_block, max(8, _round_up(pl.cdiv(batch, 2), 8)))
    batch_p = _round_up(batch, bb)
    if batch_p != batch:
        x = jnp.pad(x, ((0, batch_p - batch), (0, 0)))
    grid = (batch_p // bb,)

    out_itemsize = jnp.dtype(out_dtype).itemsize
    flops = 2 * batch_p * (in_size * hidden + 5 * hidden * hidden + hidden * n_pad)
    bytes_accessed = (
        batch_p * in_size * x.dtype.itemsize            # x
        + (w_in.size + w_fc.size + w_out.size) * 2      # bf16 weights
        + (b_in.size + b_fc.size + b_out.size) * 4      # f32 biases
        + batch_p * n_pad * out_itemsize                # output
    )

    out = pl.pallas_call(
        mlp1_kernel,
        out_shape=jax.ShapeDtypeStruct((batch_p, n_pad), out_dtype),
        grid_spec=pltpu.PrefetchScalarGridSpec(
            num_scalar_prefetch=0,
            grid=grid,
            in_specs=[
                pl.BlockSpec((bb, in_size), lambda i: (i, 0)),        # x: batch-tiled
                pl.BlockSpec((in_size, hidden), lambda i: (0, 0)),    # w_in: resident
                pl.BlockSpec((1, hidden), lambda i: (0, 0)),          # b_in: resident
                pl.BlockSpec((hidden, hidden), lambda i: (0, 0)),     # w_fc: resident
                pl.BlockSpec((1, hidden), lambda i: (0, 0)),          # b_fc: resident
                pl.BlockSpec((hidden, n_pad), lambda i: (0, 0)),      # w_out: resident
                pl.BlockSpec((1, n_pad), lambda i: (0, 0)),           # b_out: resident
            ],
            out_specs=pl.BlockSpec((bb, n_pad), lambda i: (i, 0)),
        ),
        compiler_params=pltpu.CompilerParams(
            dimension_semantics=("parallel",),
        ),
        cost_estimate=pl.CostEstimate(
            flops=flops, transcendentals=0, bytes_accessed=bytes_accessed),
    )(x, w_in, b_in, w_fc, b_fc, w_out, b_out)

    return out[:batch, :out_size]


def reference_forward(x, w_in, b_in, w_fc, b_fc, w_out, b_out):
    # Mimics the kernel's numerics: bf16-rounded operands, f32 accumulation.
    def dot_bf16(a, w):
        return jnp.dot(a.astype(jnp.bfloat16).astype(jnp.float32),
                       w.astype(jnp.bfloat16).astype(jnp.float32),
                       preferred_element_type=jnp.float32)

    h = jnp.maximum(dot_bf16(x, w_in) + b_in, 0.0)
    for _ in range(5):
        h = jnp.maximum(dot_bf16(h, w_fc) + b_fc, 0.0)
    return jnp.maximum(dot_bf16(h, w_out) + b_out, 0.0)


if __name__ == "__main__":
    input_size = 32
    output_size = 32
    hidden = 512
    batch = 8

    key = jax.random.PRNGKey(0)
    kx, k1, k2, k3, k4, k5, k6 = jax.random.split(key, 7)

    # Deterministic, PyTorch-Linear-style uniform init: U(-1/sqrt(fan_in), 1/sqrt(fan_in)).
    def init_linear(kw, kb, fan_in, fan_out):
        bound = 1.0 / jnp.sqrt(jnp.float32(fan_in))
        w = jax.random.uniform(kw, (fan_in, fan_out), jnp.float32, -bound, bound)
        b = jax.random.uniform(kb, (1, fan_out), jnp.float32, -bound, bound)
        return w, b

    x = jax.random.normal(kx, (batch, input_size), jnp.float32)
    w_in, b_in = init_linear(k1, k2, input_size, hidden)
    w_fc, b_fc = init_linear(k3, k4, hidden, hidden)
    w_out, b_out = init_linear(k5, k6, hidden, output_size)

    # One-time weight prep (outside the per-call / jitted path).
    params = prepare_mlp1_params(w_in, b_in, w_fc, b_fc, w_out, b_out)

    fwd = jax.jit(mlp1_forward, static_argnums=(2,))
    out = fwd(x, params, output_size)
    out = jax.block_until_ready(out)

    ref = reference_forward(x, w_in, b_in, w_fc, b_fc, w_out, b_out)
    assert out.shape == (batch, output_size)
    # Tolerance is valid because the reference applies identical bf16 operand rounding;
    # a pure-f32 reference would differ at ~1e-2 after seven chained bf16 matmuls.
    assert jnp.allclose(out, ref, atol=2e-3, rtol=2e-3), "mismatch vs JAX reference"

    print("KERNEL_OK")
</pallas_src>

<mosaic_0001>
module attributes {stable_mosaic.version = 11 : i64} {
  func.func @mlp1_kernel(%arg0: i32, %arg1: memref<8x32xf32, #tpu.memory_space<vmem>>, %arg2: memref<32x512xbf16, #tpu.memory_space<vmem>>, %arg3: memref<1x512xf32, #tpu.memory_space<vmem>>, %arg4: memref<512x512xbf16, #tpu.memory_space<vmem>>, %arg5: memref<1x512xf32, #tpu.memory_space<vmem>>, %arg6: memref<512x128xbf16, #tpu.memory_space<vmem>>, %arg7: memref<1x128xf32, #tpu.memory_space<vmem>>, %arg8: memref<8x128xf32, #tpu.memory_space<vmem>>) attributes {dimension_semantics = [#tpu.dimension_semantics<parallel>], iteration_bounds = array<i64: 1>, scalar_prefetch = 0 : i64, scratch_operands = 0 : i64, tpu.core_type = #tpu.core_type<tc>, window_params = [{transform_indices = @transform_0, window_bounds = array<i64: 8, 32>}, {pipeline_mode = #tpu.pipeline_mode<synchronous>, transform_indices = @transform_1, window_bounds = array<i64: 32, 512>}, {pipeline_mode = #tpu.pipeline_mode<synchronous>, transform_indices = @transform_2, window_bounds = array<i64: 1, 512>}, {pipeline_mode = #tpu.pipeline_mode<synchronous>, transform_indices = @transform_3, window_bounds = array<i64: 512, 512>}, {pipeline_mode = #tpu.pipeline_mode<synchronous>, transform_indices = @transform_4, window_bounds = array<i64: 1, 512>}, {pipeline_mode = #tpu.pipeline_mode<synchronous>, transform_indices = @transform_5, window_bounds = array<i64: 512, 128>}, {pipeline_mode = #tpu.pipeline_mode<synchronous>, transform_indices = @transform_6, window_bounds = array<i64: 1, 128>}, {transform_indices = @transform_7, window_bounds = array<i64: 8, 128>}]} {
    %c0 = arith.constant 0 : index
    %c0_0 = arith.constant 0 : index
    %0 = vector.load %arg3[%c0, %c0_0] : memref<1x512xf32, #tpu.memory_space<vmem>>, vector<1x512xf32>
    %c0_1 = arith.constant 0 : index
    %c0_2 = arith.constant 0 : index
    %1 = vector.load %arg5[%c0_1, %c0_2] : memref<1x512xf32, #tpu.memory_space<vmem>>, vector<1x512xf32>
    %c0_3 = arith.constant 0 : index
    %c0_4 = arith.constant 0 : index
    %2 = vector.load %arg7[%c0_3, %c0_4] : memref<1x128xf32, #tpu.memory_space<vmem>>, vector<1x128xf32>
    %c0_5 = arith.constant 0 : index
    %c0_6 = arith.constant 0 : index
    %3 = vector.load %arg1[%c0_5, %c0_6] : memref<8x32xf32, #tpu.memory_space<vmem>>, vector<8x32xf32>
    %4 = arith.truncf %3 : vector<8x32xf32> to vector<8x32xbf16>
    %c0_7 = arith.constant 0 : index
    %c0_8 = arith.constant 0 : index
    %5 = vector.load %arg2[%c0_7, %c0_8] : memref<32x512xbf16, #tpu.memory_space<vmem>>, vector<32x512xbf16>
    %cst = arith.constant dense<0.000000e+00> : vector<8x512xf32>
    %6 = tpu.matmul %4, %5, %cst {dimension_numbers = #tpu.dot_dimension_numbers<[1], [0], [0], [1], [0, 0, 1, 1], [], []>} : vector<8x32xbf16>, vector<32x512xbf16>, vector<8x512xf32> -> vector<8x512xf32>
    %7 = vector.broadcast %0 : vector<1x512xf32> to vector<8x512xf32>
    %8 = arith.addf %6, %7 : vector<8x512xf32>
    %cst_9 = arith.constant 0.000000e+00 : f32
    %9 = vector.broadcast %cst_9 : f32 to vector<8x512xf32>
    %10 = arith.maximumf %8, %9 : vector<8x512xf32>
    %c0_i32 = arith.constant 0 : i32
    %11 = arith.truncf %10 : vector<8x512xf32> to vector<8x512xbf16>
    %c0_10 = arith.constant 0 : index
    %c0_11 = arith.constant 0 : index
    %12 = vector.load %arg4[%c0_10, %c0_11] : memref<512x512xbf16, #tpu.memory_space<vmem>>, vector<512x512xbf16>
    %cst_12 = arith.constant dense<0.000000e+00> : vector<8x512xf32>
    %13 = tpu.matmul %11, %12, %cst_12 {dimension_numbers = #tpu.dot_dimension_numbers<[1], [0], [0], [1], [0, 0, 1, 1], [], []>} : vector<8x512xbf16>, vector<512x512xbf16>, vector<8x512xf32> -> vector<8x512xf32>
    %14 = vector.broadcast %1 : vector<1x512xf32> to vector<8x512xf32>
    %15 = arith.addf %13, %14 : vector<8x512xf32>
    %cst_13 = arith.constant 0.000000e+00 : f32
    %16 = vector.broadcast %cst_13 : f32 to vector<8x512xf32>
    %17 = arith.maximumf %15, %16 : vector<8x512xf32>
    %c1_i32 = arith.constant 1 : i32
    %18 = arith.truncf %17 : vector<8x512xf32> to vector<8x512xbf16>
    %c0_14 = arith.constant 0 : index
    %c0_15 = arith.constant 0 : index
    %19 = vector.load %arg4[%c0_14, %c0_15] : memref<512x512xbf16, #tpu.memory_space<vmem>>, vector<512x512xbf16>
    %cst_16 = arith.constant dense<0.000000e+00> : vector<8x512xf32>
    %20 = tpu.matmul %18, %19, %cst_16 {dimension_numbers = #tpu.dot_dimension_numbers<[1], [0], [0], [1], [0, 0, 1, 1], [], []>} : vector<8x512xbf16>, vector<512x512xbf16>, vector<8x512xf32> -> vector<8x512xf32>
    %21 = vector.broadcast %1 : vector<1x512xf32> to vector<8x512xf32>
    %22 = arith.addf %20, %21 : vector<8x512xf32>
    %cst_17 = arith.constant 0.000000e+00 : f32
    %23 = vector.broadcast %cst_17 : f32 to vector<8x512xf32>
    %24 = arith.maximumf %22, %23 : vector<8x512xf32>
    %c2_i32 = arith.constant 2 : i32
    %25 = arith.truncf %24 : vector<8x512xf32> to vector<8x512xbf16>
    %c0_18 = arith.constant 0 : index
    %c0_19 = arith.constant 0 : index
    %26 = vector.load %arg4[%c0_18, %c0_19] : memref<512x512xbf16, #tpu.memory_space<vmem>>, vector<512x512xbf16>
    %cst_20 = arith.constant dense<0.000000e+00> : vector<8x512xf32>
    %27 = tpu.matmul %25, %26, %cst_20 {dimension_numbers = #tpu.dot_dimension_numbers<[1], [0], [0], [1], [0, 0, 1, 1], [], []>} : vector<8x512xbf16>, vector<512x512xbf16>, vector<8x512xf32> -> vector<8x512xf32>
    %28 = vector.broadcast %1 : vector<1x512xf32> to vector<8x512xf32>
    %29 = arith.addf %27, %28 : vector<8x512xf32>
    %cst_21 = arith.constant 0.000000e+00 : f32
    %30 = vector.broadcast %cst_21 : f32 to vector<8x512xf32>
    %31 = arith.maximumf %29, %30 : vector<8x512xf32>
    %c3_i32 = arith.constant 3 : i32
    %32 = arith.truncf %31 : vector<8x512xf32> to vector<8x512xbf16>
    %c0_22 = arith.constant 0 : index
    %c0_23 = arith.constant 0 : index
    %33 = vector.load %arg4[%c0_22, %c0_23] : memref<512x512xbf16, #tpu.memory_space<vmem>>, vector<512x512xbf16>
    %cst_24 = arith.constant dense<0.000000e+00> : vector<8x512xf32>
    %34 = tpu.matmul %32, %33, %cst_24 {dimension_numbers = #tpu.dot_dimension_numbers<[1], [0], [0], [1], [0, 0, 1, 1], [], []>} : vector<8x512xbf16>, vector<512x512xbf16>, vector<8x512xf32> -> vector<8x512xf32>
    %35 = vector.broadcast %1 : vector<1x512xf32> to vector<8x512xf32>
    %36 = arith.addf %34, %35 : vector<8x512xf32>
    %cst_25 = arith.constant 0.000000e+00 : f32
    %37 = vector.broadcast %cst_25 : f32 to vector<8x512xf32>
    %38 = arith.maximumf %36, %37 : vector<8x512xf32>
    %c4_i32 = arith.constant 4 : i32
    %39 = arith.truncf %38 : vector<8x512xf32> to vector<8x512xbf16>
    %c0_26 = arith.constant 0 : index
    %c0_27 = arith.constant 0 : index
    %40 = vector.load %arg4[%c0_26, %c0_27] : memref<512x512xbf16, #tpu.memory_space<vmem>>, vector<512x512xbf16>
    %cst_28 = arith.constant dense<0.000000e+00> : vector<8x512xf32>
    %41 = tpu.matmul %39, %40, %cst_28 {dimension_numbers = #tpu.dot_dimension_numbers<[1], [0], [0], [1], [0, 0, 1, 1], [], []>} : vector<8x512xbf16>, vector<512x512xbf16>, vector<8x512xf32> -> vector<8x512xf32>
    %42 = vector.broadcast %1 : vector<1x512xf32> to vector<8x512xf32>
    %43 = arith.addf %41, %42 : vector<8x512xf32>
    %cst_29 = arith.constant 0.000000e+00 : f32
    %44 = vector.broadcast %cst_29 : f32 to vector<8x512xf32>
    %45 = arith.maximumf %43, %44 : vector<8x512xf32>
    %46 = arith.truncf %45 : vector<8x512xf32> to vector<8x512xbf16>
    %c0_30 = arith.constant 0 : index
    %c0_31 = arith.constant 0 : index
    %47 = vector.load %arg6[%c0_30, %c0_31] : memref<512x128xbf16, #tpu.memory_space<vmem>>, vector<512x128xbf16>
    %cst_32 = arith.constant dense<0.000000e+00> : vector<8x128xf32>
    %48 = tpu.matmul %46, %47, %cst_32 {dimension_numbers = #tpu.dot_dimension_numbers<[1], [0], [0], [1], [0, 0, 1, 1], [], []>} : vector<8x512xbf16>, vector<512x128xbf16>, vector<8x128xf32> -> vector<8x128xf32>
    %49 = vector.broadcast %2 : vector<1x128xf32> to vector<8x128xf32>
    %50 = arith.addf %48, %49 : vector<8x128xf32>
    %cst_33 = arith.constant 0.000000e+00 : f32
    %51 = vector.broadcast %cst_33 : f32 to vector<8x128xf32>
    %52 = arith.maximumf %50, %51 : vector<8x128xf32>
    %c0_34 = arith.constant 0 : index
    %c0_35 = arith.constant 0 : index
    %53 = vector.load %arg8[%c0_34, %c0_35] : memref<8x128xf32, #tpu.memory_space<vmem>>, vector<8x128xf32>
    tpu.vector_store %arg8[%c0_34, %c0_35], %52 {strides = array<i32>} : memref<8x128xf32, #tpu.memory_space<vmem>>, vector<8x128xf32>,
    return
  }
  func.func @transform_0(%arg0: i32) -> (i32, i32) {
    %c0_i32 = arith.constant 0 : i32
    %c0_i32_0 = arith.constant 0 : i32
    return %arg0, %c0_i32 : i32, i32
  }
  func.func @transform_1(%arg0: i32) -> (i32, i32) {
    %c0_i32 = arith.constant 0 : i32
    %c0_i32_0 = arith.constant 0 : i32
    %c0_i32_1 = arith.constant 0 : i32
    return %c0_i32, %c0_i32_0 : i32, i32
  }
  func.func @transform_2(%arg0: i32) -> (i32, i32) {
    %c0_i32 = arith.constant 0 : i32
    %c0_i32_0 = arith.constant 0 : i32
    %c0_i32_1 = arith.constant 0 : i32
    return %c0_i32, %c0_i32_0 : i32, i32
  }
  func.func @transform_3(%arg0: i32) -> (i32, i32) {
    %c0_i32 = arith.constant 0 : i32
    %c0_i32_0 = arith.constant 0 : i32
    %c0_i32_1 = arith.constant 0 : i32
    return %c0_i32, %c0_i32_0 : i32, i32
  }
  func.func @transform_4(%arg0: i32) -> (i32, i32) {
    %c0_i32 = arith.constant 0 : i32
    %c0_i32_0 = arith.constant 0 : i32
    %c0_i32_1 = arith.constant 0 : i32
    return %c0_i32, %c0_i32_0 : i32, i32
  }
  func.func @transform_5(%arg0: i32) -> (i32, i32) {
    %c0_i32 = arith.constant 0 : i32
    %c0_i32_0 = arith.constant 0 : i32
    %c0_i32_1 = arith.constant 0 : i32
    return %c0_i32, %c0_i32_0 : i32, i32
  }
  func.func @transform_6(%arg0: i32) -> (i32, i32) {
    %c0_i32 = arith.constant 0 : i32
    %c0_i32_0 = arith.constant 0 : i32
    %c0_i32_1 = arith.constant 0 : i32
    return %c0_i32, %c0_i32_0 : i32, i32
  }
  func.func @transform_7(%arg0: i32) -> (i32, i32) {
    %c0_i32 = arith.constant 0 : i32
    %c0_i32_0 = arith.constant 0 : i32
    return %arg0, %c0_i32 : i32, i32
  }
}

</mosaic_0001>

<llo_original>
// kernel: mlp1_forward.1
$region0: #{mlp1_forward.1}
  #allocation0 [shape = 'u32[]', space=smem, size = 0x4, offset = 0x4, fixed_abs, tag = 'smem constant byte address 0x4 - core index']
  #allocation1 [shape = 'u32[144,128]{1,0:T(1,128)}', space=vmem, size = 0x12000, scoped, tag = 'internal scratch']
  %s0 = inlined_call_operand.hbm [shape: f32[8,32], index: 0, kind: input, shape index: {}]
  %s1 = inlined_call_operand.hbm [shape: bf16[32,512], index: 1, kind: input, shape index: {}]
  %s2 = inlined_call_operand.vmem [shape: f32[1,512], index: 2, kind: input, shape index: {}]
  %s3 = inlined_call_operand.hbm [shape: bf16[512,512], index: 3, kind: input, shape index: {}]
  %s4 = inlined_call_operand.vmem [shape: f32[1,512], index: 4, kind: input, shape index: {}]
  %s5 = inlined_call_operand.hbm [shape: bf16[512,128], index: 5, kind: input, shape index: {}]
  %s6 = inlined_call_operand.vmem [shape: f32[1,128], index: 6, kind: input, shape index: {}]
  %s7 = inlined_call_operand.hbm [shape: f32[8,128], index: 7, kind: output, shape index: {}]
  %s8 = sld [smem:[#allocation0]]
  $region54: #{mlp1_forward.1} parent=0
    _
  %s10 = ssub.s32 1, %s8
  %s11 = scalar_select 0, %s10, %s8
  $region1: #{mlp1_forward.1} parent=0
    #allocation2 [shape = 'u8[4096]{0}', space=vmem, size = 0x1000, scoped, tag = 'input window, operand 0, single buffered']
    #allocation3 [shape = 's32[1]{0}', space=sflag, size = 0x4, scoped, tag = 'scoped memory for mlp1_forward.1']
    #allocation4 [shape = 's32[1]{0}', space=sflag, size = 0x4, scoped, tag = 'scoped memory for mlp1_forward.1']
    #allocation5 [shape = 'u8[32768]{0}', space=vmem, size = 0x8000, scoped, tag = 'input window, operand 1, single buffered']
    #allocation6 [shape = 's32[1]{0}', space=sflag, size = 0x4, scoped, tag = 'scoped memory for mlp1_forward.1']
    #allocation7 [shape = 'u8[524288]{0}', space=vmem, size = 0x80000, scoped, tag = 'input window, operand 3, single buffered']
    #allocation8 [shape = 'u8[131072]{0}', space=vmem, size = 0x20000, scoped, tag = 'input window, operand 5, single buffered']
    #allocation9 [shape = 's32[1]{0}', space=sflag, size = 0x4, scoped, tag = 'scoped memory for mlp1_forward.1']
    #allocation10 [shape = 'u8[4096]{0}', space=vmem, size = 0x1000, scoped, tag = 'output window, operand 0, single buffered']
    %12 = vsyncpa [#allocation3], 0
    %13 = vsyncpa [#allocation6], 0
    %14 = vsyncpa [#allocation9], 0
    %15 = vsyncpa [#allocation4], 0
    // Predicated region
    $region2: #{mlp1_forward.1} parent=1 // pred_check
      _
    $region3: #{mlp1_forward.1} parent=1 // pred_check_branch
      %17 = sbr.rel (0) target = $region5
    $region4: #{mlp1_forward.1} parent=1 // pred_region
      %s19 = ssub.s32 128, 128
      %20 = vsyncadd [#allocation3], %s19
      %s22 = sshll.u32 [#allocation2], 4
      %s23 = int_to_ptr.vmem [resolvable:$true] %s22
      %25 = dma.hbm_to_vmem [thread:$0]  %s0, 128, %s23, [#allocation3]
    $region5: #{mlp1_forward.1} parent=1 // pred_fallthru
      _
    // Predicated region
    $region6: #{mlp1_forward.1} parent=1 // pred_check
      _
    $region7: #{mlp1_forward.1} parent=1 // pred_check_branch
      %27 = sbr.rel (0) target = $region9
    $region8: #{mlp1_forward.1} parent=1 // pred_region
      %s29 = ssub.s32 1024, 1024
      %30 = vsyncadd [#allocation6], %s29
      %s31 = sshll.u32 [#allocation5], 4
      %s32 = int_to_ptr.vmem [resolvable:$true] %s31
      %37 = dma.hbm_to_vmem [thread:$0]  %s1, 1024, %s32, [#allocation6], 256, 256, 16
    $region9: #{mlp1_forward.1} parent=1 // pred_fallthru
      _
    // Predicated region
    $region10: #{mlp1_forward.1} parent=1 // pred_check
      _
    $region11: #{mlp1_forward.1} parent=1 // pred_check_branch
      %39 = sbr.rel (0) target = $region13
    $region12: #{mlp1_forward.1} parent=1 // pred_region
      _
    $region13: #{mlp1_forward.1} parent=1 // pred_fallthru
      _
    // Predicated region
    $region14: #{mlp1_forward.1} parent=1 // pred_check
      _
    $region15: #{mlp1_forward.1} parent=1 // pred_check_branch
      %41 = sbr.rel (0) target = $region17
    $region16: #{mlp1_forward.1} parent=1 // pred_region
      %s43 = ssub.s32 16384, 16384
      %44 = vsyncadd [#allocation6], %s43
      %s45 = sshll.u32 [#allocation7], 4
      %s46 = int_to_ptr.vmem [resolvable:$true] %s45
      %51 = dma.hbm_to_vmem [thread:$0]  %s3, 16384, %s46, [#allocation6], 256, 256, 16
    $region17: #{mlp1_forward.1} parent=1 // pred_fallthru
      _
    // Predicated region
    $region18: #{mlp1_forward.1} parent=1 // pred_check
      _
    $region19: #{mlp1_forward.1} parent=1 // pred_check_branch
      %53 = sbr.rel (0) target = $region21
    $region20: #{mlp1_forward.1} parent=1 // pred_region
      _
    $region21: #{mlp1_forward.1} parent=1 // pred_fallthru
      _
    // Predicated region
    $region22: #{mlp1_forward.1} parent=1 // pred_check
      _
    $region23: #{mlp1_forward.1} parent=1 // pred_check_branch
      %55 = sbr.rel (0) target = $region25
    $region24: #{mlp1_forward.1} parent=1 // pred_region
      %s57 = ssub.s32 4096, 4096
      %58 = vsyncadd [#allocation9], %s57
      %s59 = sshll.u32 [#allocation8], 4
      %s60 = int_to_ptr.vmem [resolvable:$true] %s59
      %65 = dma.hbm_to_vmem [thread:$0]  %s5, 4096, %s60, [#allocation9], 64, 64, 4
    $region25: #{mlp1_forward.1} parent=1 // pred_fallthru
      _
    // Predicated region
    $region26: #{mlp1_forward.1} parent=1 // pred_check
      _
    $region27: #{mlp1_forward.1} parent=1 // pred_check_branch
      %67 = sbr.rel (0) target = $region29
    $region28: #{mlp1_forward.1} parent=1 // pred_region
      _
    $region29: #{mlp1_forward.1} parent=1 // pred_fallthru
      _
    // Predicated region
    $region30: #{mlp1_forward.1} parent=1 // pred_check
      _
    $region31: #{mlp1_forward.1} parent=1 // pred_check_branch
      %69 = sbr.rel (0) target = $region33
    $region32: #{mlp1_forward.1} parent=1 // pred_region
      %70 = dma.done [#allocation3], 128
    $region33: #{mlp1_forward.1} parent=1 // pred_fallthru
      _
    // Predicated region
    $region34: #{mlp1_forward.1} parent=1 // pred_check
      _
    $region35: #{mlp1_forward.1} parent=1 // pred_check_branch
      %72 = sbr.rel (0) target = $region37
    $region36: #{mlp1_forward.1} parent=1 // pred_region
      %73 = dma.done [#allocation6], 1024
    $region37: #{mlp1_forward.1} parent=1 // pred_fallthru
      _
    // Predicated region
    $region38: #{mlp1_forward.1} parent=1 // pred_check
      _
    $region39: #{mlp1_forward.1} parent=1 // pred_check_branch
      %75 = sbr.rel (0) target = $region41
    $region40: #{mlp1_forward.1} parent=1 // pred_region
      %76 = dma.done [#allocation6], 16384
    $region41: #{mlp1_forward.1} parent=1 // pred_fallthru
      _
    // Predicated region
    $region42: #{mlp1_forward.1} parent=1 // pred_check
      _
    $region43: #{mlp1_forward.1} parent=1 // pred_check_branch
      %78 = sbr.rel (0) target = $region45
    $region44: #{mlp1_forward.1} parent=1 // pred_region
      %79 = dma.done [#allocation9], 4096
    $region45: #{mlp1_forward.1} parent=1 // pred_fallthru
      _
    %v81 = vld [vmem:[%s2] sm:$0xf]
    %v82 = vld [vmem:[%s4] sm:$0xf]
    %v83 = vld [vmem:[%s6] sm:$0x1]
    %v84 = vld [vmem:[#allocation2] sm:$0xff]
    %v85 = vpack.c.bf16 %v84, %v84
    %v86 = vld [vmem:[#allocation5] sm:$0xff]
    %v87 = vld [vmem:[#allocation5 + $0x8] sm:$0xff]
    %v88 = vld [vmem:[#allocation5 + $0x10] sm:$0xff]
    %v89 = vld [vmem:[#allocation5 + $0x18] sm:$0xff]
    %v90 = vld [vmem:[#allocation5 + $0x20] sm:$0xff]
    %v91 = vld [vmem:[#allocation5 + $0x28] sm:$0xff]
    %v92 = vld [vmem:[#allocation5 + $0x30] sm:$0xff]
    %v93 = vld [vmem:[#allocation5 + $0x38] sm:$0xff]
    %v95 = vlaneseq
    %v96 = vshrl.u32 %v95, 7
    %v97 = vsub.s32 0, %v96
    %v98 = vrot.slane %v81, %v97
    %v99 = vlaneseq
    %v100 = vshrl.u32 %v99, 7
    %v101 = vsub.s32 1, %v100
    %v102 = vrot.slane %v81, %v101
    %v103 = vlaneseq
    %v104 = vshrl.u32 %v103, 7
    %v105 = vsub.s32 2, %v104
    %v106 = vrot.slane %v81, %v105
    %v107 = vlaneseq
    %v108 = vshrl.u32 %v107, 7
    %v109 = vsub.s32 3, %v108
    %v110 = vrot.slane %v81, %v109
    %v123 = vunpack.c.l.b16 %v86
    %v124 = vunpack.c.h.b16 %v86
    %v125 = vunpack.c.l.b16 %v87
    %v126 = vunpack.c.h.b16 %v87
    %v127 = vunpack.c.l.b16 %v88
    %v128 = vunpack.c.h.b16 %v88
    %v129 = vunpack.c.l.b16 %v89
    %v130 = vunpack.c.h.b16 %v89
    %v131 = vunpack.c.l.b16 %v90
    %v132 = vunpack.c.h.b16 %v90
    %v133 = vunpack.c.l.b16 %v91
    %v134 = vunpack.c.h.b16 %v91
    %v135 = vunpack.c.l.b16 %v92
    %v136 = vunpack.c.h.b16 %v92
    %v137 = vunpack.c.l.b16 %v93
    %v138 = vunpack.c.h.b16 %v93
    %v139 = vpack.c.b16 %v127, %v123
    %v140 = vpack.c.b16 %v128, %v124
    %v141 = vpack.c.b16 %v129, %v125
    %v142 = vpack.c.b16 %v130, %v126
    %v143 = vpack.c.b16 %v135, %v131
    %v144 = vpack.c.b16 %v136, %v132
    %v145 = vpack.c.b16 %v137, %v133
    %v146 = vpack.c.b16 %v138, %v134
    %vm155 = vcmask 261120
    %v157 = vsel %vm155, %v85, 0
    %159 = vmatprep.subr.bf16.mxu0 %v140
    %160 = vmatpush1.bf16.msra.mxu0 %v139
    %161 = vmatprep.subr.bf16.mxu0 %v144
    %162 = vmatpush1.bf16.msra.mxu0 %v143
    %163 = vmatprep.subr.bf16.mxu0 0
    %164 = vmatpush1.bf16.msra.mxu0 0
    %165 = vmatprep.subr.bf16.mxu0 0
    %166 = vmatpush1.bf16.msra.mxu0 0
    %167 = vmatprep.subr.bf16.mxu0 0
    %168 = vmatpush1.bf16.msra.mxu0 0
    %169 = vmatprep.subr.bf16.mxu0 0
    %170 = vmatpush1.bf16.msra.mxu0 0
    %171 = vmatprep.subr.bf16.mxu0 0
    %172 = vmatpush1.bf16.msra.mxu0 0
    %173 = vmatprep.subr.bf16.mxu0 0
    %174 = vmatpush1.bf16.msra.mxu0 0
    %175 = vmatprep.subr.bf16.mxu0 0
    %176 = vmatpush1.bf16.msra.mxu0 0
    %177 = vmatprep.subr.bf16.mxu0 0
    %178 = vmatpush1.bf16.msra.mxu0 0
    %179 = vmatprep.subr.bf16.mxu0 0
    %180 = vmatpush1.bf16.msra.mxu0 0
    %181 = vmatprep.subr.bf16.mxu0 0
    %182 = vmatpush1.bf16.msra.mxu0 0
    %183 = vmatprep.subr.bf16.mxu0 0
    %184 = vmatpush1.bf16.msra.mxu0 0
    %185 = vmatprep.subr.bf16.mxu0 0
    %186 = vmatpush1.bf16.msra.mxu0 0
    %187 = vmatprep.subr.bf16.mxu0 0
    %188 = vmatpush1.bf16.msra.mxu0 0
    %189 = vmatprep.subr.bf16.mxu0 0
    %190 = vmatpush1.bf16.msra.mxu0 0
    %191 = vmatprep.mubr.bf16.mxu0 0
    %192 = vmatmul.mubr.bf16.gmra.mrb[0].mxu0 %v157
    %v193 = vpop.f32.mrb[0].mxu0
    %v194 = vadd.f32 %v98, %v193
    %v195 = vpop.f32.mrb[0].mxu0
    %v196 = vadd.f32 %v102, %v195
    %v197 = vpop.f32.mrb[0].mxu0
    %v198 = vpop.f32.mrb[0].mxu0
    %199 = vdwg.mxu0
    %200 = vmatprep.subr.bf16.mxu0 %v142
    %201 = vmatpush1.bf16.msra.mxu0 %v141
    %202 = vmatprep.subr.bf16.mxu0 %v146
    %203 = vmatpush1.bf16.msra.mxu0 %v145
    %204 = vmatprep.subr.bf16.mxu0 0
    %205 = vmatpush1.bf16.msra.mxu0 0
    %206 = vmatprep.subr.bf16.mxu0 0
    %207 = vmatpush1.bf16.msra.mxu0 0
    %208 = vmatprep.subr.bf16.mxu0 0
    %209 = vmatpush1.bf16.msra.mxu0 0
    %210 = vmatprep.subr.bf16.mxu0 0
    %211 = vmatpush1.bf16.msra.mxu0 0
    %212 = vmatprep.subr.bf16.mxu0 0
    %213 = vmatpush1.bf16.msra.mxu0 0
    %214 = vmatprep.subr.bf16.mxu0 0
    %215 = vmatpush1.bf16.msra.mxu0 0
    %216 = vmatprep.subr.bf16.mxu0 0
    %217 = vmatpush1.bf16.msra.mxu0 0
    %218 = vmatprep.subr.bf16.mxu0 0
    %219 = vmatpush1.bf16.msra.mxu0 0
    %220 = vmatprep.subr.bf16.mxu0 0
    %221 = vmatpush1.bf16.msra.mxu0 0
    %222 = vmatprep.subr.bf16.mxu0 0
    %223 = vmatpush1.bf16.msra.mxu0 0
    %224 = vmatprep.subr.bf16.mxu0 0
    %225 = vmatpush1.bf16.msra.mxu0 0
    %226 = vmatprep.subr.bf16.mxu0 0
    %227 = vmatpush1.bf16.msra.mxu0 0
    %228 = vmatprep.subr.bf16.mxu0 0
    %229 = vmatpush1.bf16.msra.mxu0 0
    %230 = vmatprep.subr.bf16.mxu0 0
    %231 = vmatpush1.bf16.msra.mxu0 0
    %232 = vmatprep.mubr.bf16.mxu0 0
    %233 = vmatmul.mubr.bf16.gmra.mrb[0].mxu0 %v157
    %v234 = vpop.f32.mrb[0].mxu0
    %v235 = vadd.f32 %v106, %v234
    %v236 = vpop.f32.mrb[0].mxu0
    %v237 = vadd.f32 %v110, %v236
    %v238 = vpop.f32.mrb[0].mxu0
    %v239 = vpop.f32.mrb[0].mxu0
    %240 = vdwg.mxu0
    %v241 = vmax.f32 %v194, 0.0
    %v242 = vmax.f32 %v196, 0.0
    %v243 = vmax.f32 %v235, 0.0
    %v244 = vmax.f32 %v237, 0.0
    %v245 = vpack.c.bf16 %v241, %v241
    %v246 = vpack.c.bf16 %v242, %v242
    %v247 = vpack.c.bf16 %v243, %v243
    %v248 = vpack.c.bf16 %v244, %v244
    %v249 = vld [vmem:[#allocation7] sm:$0xff]
    %v250 = vld [vmem:[#allocation7 + $0x8] sm:$0xff]
    %v251 = vld [vmem:[#allocation7 + $0x10] sm:$0xff]
    %v252 = vld [vmem:[#allocation7 + $0x18] sm:$0xff]
    %v253 = vld [vmem:[#allocation7 + $0x20] sm:$0xff]
    %v254 = vld [vmem:[#allocation7 + $0x28] sm:$0xff]
    %v255 = vld [vmem:[#allocation7 + $0x30] sm:$0xff]
    %v256 = vld [vmem:[#allocation7 + $0x38] sm:$0xff]
    %v257 = vld [vmem:[#allocation7 + $0x40] sm:$0xff]
    %v258 = vld [vmem:[#allocation7 + $0x48] sm:$0xff]
    %v259 = vld [vmem:[#allocation7 + $0x50] sm:$0xff]
    %v260 = vld [vmem:[#allocation7 + $0x58] sm:$0xff]
    %v261 = vld [vmem:[#allocation7 + $0x60] sm:$0xff]
    %v262 = vld [vmem:[#allocation7 + $0x68] sm:$0xff]
    %v263 = vld [vmem:[#allocation7 + $0x70] sm:$0xff]
    %v264 = vld [vmem:[#allocation7 + $0x78] sm:$0xff]
    %v265 = vld [vmem:[#allocation7 + $0x80] sm:$0xff]
    %v266 = vld [vmem:[#allocation7 + $0x88] sm:$0xff]
    %v267 = vld [vmem:[#allocation7 + $0x90] sm:$0xff]
    %v268 = vld [vmem:[#allocation7 + $0x98] sm:$0xff]
    %v269 = vld [vmem:[#allocation7 + $0xa0] sm:$0xff]
    %v270 = vld [vmem:[#allocation7 + $0xa8] sm:$0xff]
    %v271 = vld [vmem:[#allocation7 + $0xb0] sm:$0xff]
    %v272 = vld [vmem:[#allocation7 + $0xb8] sm:$0xff]
    %v273 = vld [vmem:[#allocation7 + $0xc0] sm:$0xff]
    %v274 = vld [vmem:[#allocation7 + $0xc8] sm:$0xff]
    %v275 = vld [vmem:[#allocation7 + $0xd0] sm:$0xff]
    %v276 = vld [vmem:[#allocation7 + $0xd8] sm:$0xff]
    %v277 = vld [vmem:[#allocation7 + $0xe0] sm:$0xff]
    %v278 = vld [vmem:[#allocation7 + $0xe8] sm:$0xff]
    %v279 = vld [vmem:[#allocation7 + $0xf0] sm:$0xff]
    %v280 = vld [vmem:[#allocation7 + $0xf8] sm:$0xff]
    %v281 = vld [vmem:[#allocation7 + $0x100] sm:$0xff]
    %v282 = vld [vmem:[#allocation7 + $0x108] sm:$0xff]
    %v283 = vld [vmem:[#allocation7 + $0x110] sm:$0xff]
    %v284 = vld [vmem:[#allocation7 + $0x118] sm:$0xff]
    %v285 = vld [vmem:[#allocation7 + $0x120] sm:$0xff]
    %v286 = vld [vmem:[#allocation7 + $0x128] sm:$0xff]
    %v287 = vld [vmem:[#allocation7 + $0x130] sm:$0xff]
    %v288 = vld [vmem:[#allocation7 + $0x138] sm:$0xff]
    %v289 = vld [vmem:[#allocation7 + $0x140] sm:$0xff]
    %v290 = vld [vmem:[#allocation7 + $0x148] sm:$0xff]
    %v291 = vld [vmem:[#allocation7 + $0x150] sm:$0xff]
    %v292 = vld [vmem:[#allocation7 + $0x158] sm:$0xff]
    %v293 = vld [vmem:[#allocation7 + $0x160] sm:$0xff]
    %v294 = vld [vmem:[#allocation7 + $0x168] sm:$0xff]
    %v295 = vld [vmem:[#allocation7 + $0x170] sm:$0xff]
    %v296 = vld [vmem:[#allocation7 + $0x178] sm:$0xff]
    %v297 = vld [vmem:[#allocation7 + $0x180] sm:$0xff]
    %v298 = vld [vmem:[#allocation7 + $0x188] sm:$0xff]
    %v299 = vld [vmem:[#allocation7 + $0x190] sm:$0xff]
    %v300 = vld [vmem:[#allocation7 + $0x198] sm:$0xff]
    %v301 = vld [vmem:[#allocation7 + $0x1a0] sm:$0xff]
    %v302 = vld [vmem:[#allocation7 + $0x1a8] sm:$0xff]
    %v303 = vld [vmem:[#allocation7 + $0x1b0] sm:$0xff]
    %v304 = vld [vmem:[#allocation7 + $0x1b8] sm:$0xff]
    %v305 = vld [vmem:[#allocation7 + $0x1c0] sm:$0xff]
    %v306 = vld [vmem:[#allocation7 + $0x1c8] sm:$0xff]
    %v307 = vld [vmem:[#allocation7 + $0x1d0] sm:$0xff]
    %v308 = vld [vmem:[#allocation7 + $0x1d8] sm:$0xff]
    %v309 = vld [vmem:[#allocation7 + $0x1e0] sm:$0xff]
    %v310 = vld [vmem:[#allocation7 + $0x1e8] sm:$0xff]
    %v311 = vld [vmem:[#allocation7 + $0x1f0] sm:$0xff]
    %v312 = vld [vmem:[#allocation7 + $0x1f8] sm:$0xff]
    %v313 = vld [vmem:[#allocation7 + $0x200] sm:$0xff]
    %v314 = vld [vmem:[#allocation7 + $0x208] sm:$0xff]
    %v315 = vld [vmem:[#allocation7 + $0x210] sm:$0xff]
    %v316 = vld [vmem:[#allocation7 + $0x218] sm:$0xff]
    %v317 = vld [vmem:[#allocation7 + $0x220] sm:$0xff]
    %v318 = vld [vmem:[#allocation7 + $0x228] sm:$0xff]
    %v319 = vld [vmem:[#allocation7 + $0x230] sm:$0xff]
    %v320 = vld [vmem:[#allocation7 + $0x238] sm:$0xff]
    %v321 = vld [vmem:[#allocation7 + $0x240] sm:$0xff]
    %v322 = vld [vmem:[#allocation7 + $0x248] sm:$0xff]
    %v323 = vld [vmem:[#allocation7 + $0x250] sm:$0xff]
    %v324 = vld [vmem:[#allocation7 + $0x258] sm:$0xff]
    %v325 = vld [vmem:[#allocation7 + $0x260] sm:$0xff]
    %v326 = vld [vmem:[#allocation7 + $0x268] sm:$0xff]
    %v327 = vld [vmem:[#allocation7 + $0x270] sm:$0xff]
    %v328 = vld [vmem:[#allocation7 + $0x278] sm:$0xff]
    %v329 = vld [vmem:[#allocation7 + $0x280] sm:$0xff]
    %v330 = vld [vmem:[#allocation7 + $0x288] sm:$0xff]
    %v331 = vld [vmem:[#allocation7 + $0x290] sm:$0xff]
    %v332 = vld [vmem:[#allocation7 + $0x298] sm:$0xff]
    %v333 = vld [vmem:[#allocation7 + $0x2a0] sm:$0xff]
    %v334 = vld [vmem:[#allocation7 + $0x2a8] sm:$0xff]
    %v335 = vld [vmem:[#allocation7 + $0x2b0] sm:$0xff]
    %v336 = vld [vmem:[#allocation7 + $0x2b8] sm:$0xff]
    %v337 = vld [vmem:[#allocation7 + $0x2c0] sm:$0xff]
    %v338 = vld [vmem:[#allocation7 + $0x2c8] sm:$0xff]
    %v339 = vld [vmem:[#allocation7 + $0x2d0] sm:$0xff]
    %v340 = vld [vmem:[#allocation7 + $0x2d8] sm:$0xff]
    %v341 = vld [vmem:[#allocation7 + $0x2e0] sm:$0xff]
    %v342 = vld [vmem:[#allocation7 + $0x2e8] sm:$0xff]
    %v343 = vld [vmem:[#allocation7 + $0x2f0] sm:$0xff]
    %v344 = vld [vmem:[#allocation7 + $0x2f8] sm:$0xff]
    %v345 = vld [vmem:[#allocation7 + $0x300] sm:$0xff]
    %v346 = vld [vmem:[#allocation7 + $0x308] sm:$0xff]
    %v347 = vld [vmem:[#allocation7 + $0x310] sm:$0xff]
    %v348 = vld [vmem:[#allocation7 + $0x318] sm:$0xff]
    %v349 = vld [vmem:[#allocation7 + $0x320] sm:$0xff]
    %v350 = vld [vmem:[#allocation7 + $0x328] sm:$0xff]
    %v351 = vld [vmem:[#allocation7 + $0x330] sm:$0xff]
    %v352 = vld [vmem:[#allocation7 + $0x338] sm:$0xff]
    %v353 = vld [vmem:[#allocation7 + $0x340] sm:$0xff]
    %v354 = vld [vmem:[#allocation7 + $0x348] sm:$0xff]
    %v355 = vld [vmem:[#allocation7 + $0x350] sm:$0xff]
    %v356 = vld [vmem:[#allocation7 + $0x358] sm:$0xff]
    %v357 = vld [vmem:[#allocation7 + $0x360] sm:$0xff]
    %v358 = vld [vmem:[#allocation7 + $0x368] sm:$0xff]
    %v359 = vld [vmem:[#allocation7 + $0x370] sm:$0xff]
    %v360 = vld [vmem:[#allocation7 + $0x378] sm:$0xff]
    %v361 = vld [vmem:[#allocation7 + $0x380] sm:$0xff]
    %v362 = vld [vmem:[#allocation7 + $0x388] sm:$0xff]
    %v363 = vld [vmem:[#allocation7 + $0x390] sm:$0xff]
    %v364 = vld [vmem:[#allocation7 + $0x398] sm:$0xff]
    %v365 = vld [vmem:[#allocation7 + $0x3a0] sm:$0xff]
    %v366 = vld [vmem:[#allocation7 + $0x3a8] sm:$0xff]
    %v367 = vld [vmem:[#allocation7 + $0x3b0] sm:$0xff]
    %v368 = vld [vmem:[#allocation7 + $0x3b8] sm:$0xff]
    %v369 = vld [vmem:[#allocation7 + $0x3c0] sm:$0xff]
    %v370 = vld [vmem:[#allocation7 + $0x3c8] sm:$0xff]
    %v371 = vld [vmem:[#allocation7 + $0x3d0] sm:$0xff]
    %v372 = vld [vmem:[#allocation7 + $0x3d8] sm:$0xff]
    %v373 = vld [vmem:[#allocation7 + $0x3e0] sm:$0xff]
    %v374 = vld [vmem:[#allocation7 + $0x3e8] sm:$0xff]
    %v375 = vld [vmem:[#allocation7 + $0x3f0] sm:$0xff]
    %v376 = vld [vmem:[#allocation7 + $0x3f8] sm:$0xff]
    %v378 = vlaneseq
    %v379 = vshrl.u32 %v378, 7
    %v380 = vsub.s32 0, %v379
    %v381 = vrot.slane %v82, %v380
    %v382 = vlaneseq
    %v383 = vshrl.u32 %v382, 7
    %v384 = vsub.s32 1, %v383
    %v385 = vrot.slane %v82, %v384
    %v386 = vlaneseq
    %v387 = vshrl.u32 %v386, 7
    %v388 = vsub.s32 2, %v387
    %v389 = vrot.slane %v82, %v388
    %v390 = vlaneseq
    %v391 = vshrl.u32 %v390, 7
    %v392 = vsub.s32 3, %v391
    %v393 = vrot.slane %v82, %v392
    %v526 = vunpack.c.l.b16 %v249
    %v527 = vunpack.c.h.b16 %v249
    %v528 = vunpack.c.l.b16 %v250
    %v529 = vunpack.c.h.b16 %v250
    %v530 = vunpack.c.l.b16 %v251
    %v531 = vunpack.c.h.b16 %v251
    %v532 = vunpack.c.l.b16 %v252
    %v533 = vunpack.c.h.b16 %v252
    %v534 = vunpack.c.l.b16 %v253
    %v535 = vunpack.c.h.b16 %v253
    %v536 = vunpack.c.l.b16 %v254
    %v537 = vunpack.c.h.b16 %v254
    %v538 = vunpack.c.l.b16 %v255
    %v539 = vunpack.c.h.b16 %v255
    %v540 = vunpack.c.l.b16 %v256
    %v541 = vunpack.c.h.b16 %v256
    %v542 = vunpack.c.l.b16 %v257
    %v543 = vunpack.c.h.b16 %v257
    %v544 = vunpack.c.l.b16 %v258
    %v545 = vunpack.c.h.b16 %v258
    %v546 = vunpack.c.l.b16 %v259
    %v547 = vunpack.c.h.b16 %v259
    %v548 = vunpack.c.l.b16 %v260
    %v549 = vunpack.c.h.b16 %v260
    %v550 = vunpack.c.l.b16 %v261
    %v551 = vunpack.c.h.b16 %v261
    %v552 = vunpack.c.l.b16 %v262
    %v553 = vunpack.c.h.b16 %v262
    %v554 = vunpack.c.l.b16 %v263
    %v555 = vunpack.c.h.b16 %v263
    %v556 = vunpack.c.l.b16 %v264
    %v557 = vunpack.c.h.b16 %v264
    %v558 = vunpack.c.l.b16 %v265
    %v559 = vunpack.c.h.b16 %v265
    %v560 = vunpack.c.l.b16 %v266
    %v561 = vunpack.c.h.b16 %v266
    %v562 = vunpack.c.l.b16 %v267
    %v563 = vunpack.c.h.b16 %v267
    %v564 = vunpack.c.l.b16 %v268
    %v565 = vunpack.c.h.b16 %v268
    %v566 = vunpack.c.l.b16 %v269
    %v567 = vunpack.c.h.b16 %v269
    %v568 = vunpack.c.l.b16 %v270
    %v569 = vunpack.c.h.b16 %v270
    %v570 = vunpack.c.l.b16 %v271
    %v571 = vunpack.c.h.b16 %v271
    %v572 = vunpack.c.l.b16 %v272
    %v573 = vunpack.c.h.b16 %v272
    %v574 = vunpack.c.l.b16 %v273
    %v575 = vunpack.c.h.b16 %v273
    %v576 = vunpack.c.l.b16 %v274
    %v577 = vunpack.c.h.b16 %v274
    %v578 = vunpack.c.l.b16 %v275
    %v579 = vunpack.c.h.b16 %v275
    %v580 = vunpack.c.l.b16 %v276
    %v581 = vunpack.c.h.b16 %v276
    %v582 = vunpack.c.l.b16 %v277
    %v583 = vunpack.c.h.b16 %v277
    %v584 = vunpack.c.l.b16 %v278
    %v585 = vunpack.c.h.b16 %v278
    %v586 = vunpack.c.l.b16 %v279
    %v587 = vunpack.c.h.b16 %v279
    %v588 = vunpack.c.l.b16 %v280
    %v589 = vunpack.c.h.b16 %v280
    %v590 = vunpack.c.l.b16 %v281
    %v591 = vunpack.c.h.b16 %v281
    %v592 = vunpack.c.l.b16 %v282
    %v593 = vunpack.c.h.b16 %v282
    %v594 = vunpack.c.l.b16 %v283
    %v595 = vunpack.c.h.b16 %v283
    %v596 = vunpack.c.l.b16 %v284
    %v597 = vunpack.c.h.b16 %v284
    %v598 = vunpack.c.l.b16 %v285
    %v599 = vunpack.c.h.b16 %v285
    %v600 = vunpack.c.l.b16 %v286
    %v601 = vunpack.c.h.b16 %v286
    %v602 = vunpack.c.l.b16 %v287
    %v603 = vunpack.c.h.b16 %v287
    %v604 = vunpack.c.l.b16 %v288
    %v605 = vunpack.c.h.b16 %v288
    %v606 = vunpack.c.l.b16 %v289
    %v607 = vunpack.c.h.b16 %v289
    %v608 = vunpack.c.l.b16 %v290
    %v609 = vunpack.c.h.b16 %v290
    %v610 = vunpack.c.l.b16 %v291
    %v611 = vunpack.c.h.b16 %v291
    %v612 = vunpack.c.l.b16 %v292
    %v613 = vunpack.c.h.b16 %v292
    %v614 = vunpack.c.l.b16 %v293
    %v615 = vunpack.c.h.b16 %v293
    %v616 = vunpack.c.l.b16 %v294
    %v617 = vunpack.c.h.b16 %v294
    %v618 = vunpack.c.l.b16 %v295
    %v619 = vunpack.c.h.b16 %v295
    %v620 = vunpack.c.l.b16 %v296
    %v621 = vunpack.c.h.b16 %v296
    %v622 = vunpack.c.l.b16 %v297
    %v623 = vunpack.c.h.b16 %v297
    %v624 = vunpack.c.l.b16 %v298
    %v625 = vunpack.c.h.b16 %v298
    %v626 = vunpack.c.l.b16 %v299
    %v627 = vunpack.c.h.b16 %v299
    %v628 = vunpack.c.l.b16 %v300
    %v629 = vunpack.c.h.b16 %v300
    %v630 = vunpack.c.l.b16 %v301
    %v631 = vunpack.c.h.b16 %v301
    %v632 = vunpack.c.l.b16 %v302
    %v633 = vunpack.c.h.b16 %v302
    %v634 = vunpack.c.l.b16 %v303
    %v635 = vunpack.c.h.b16 %v303
    %v636 = vunpack.c.l.b16 %v304
    %v637 = vunpack.c.h.b16 %v304
    %v638 = vunpack.c.l.b16 %v305
    %v639 = vunpack.c.h.b16 %v305
    %v640 = vunpack.c.l.b16 %v306
    %v641 = vunpack.c.h.b16 %v306
    %v642 = vunpack.c.l.b16 %v307
    %v643 = vunpack.c.h.b16 %v307
    %v644 = vunpack.c.l.b16 %v308
    %v645 = vunpack.c.h.b16 %v308
    %v646 = vunpack.c.l.b16 %v309
    %v647 = vunpack.c.h.b16 %v309
    %v648 = vunpack.c.l.b16 %v310
    %v649 = vunpack.c.h.b16 %v310
    %v650 = vunpack.c.l.b16 %v311
    %v651 = vunpack.c.h.b16 %v311
    %v652 = vunpack.c.l.b16 %v312
    %v653 = vunpack.c.h.b16 %v312
    %v654 = vunpack.c.l.b16 %v313
    %v655 = vunpack.c.h.b16 %v313
    %v656 = vunpack.c.l.b16 %v314
    %v657 = vunpack.c.h.b16 %v314
    %v658 = vunpack.c.l.b16 %v315
    %v659 = vunpack.c.h.b16 %v315
    %v660 = vunpack.c.l.b16 %v316
    %v661 = vunpack.c.h.b16 %v316
    %v662 = vunpack.c.l.b16 %v317
    %v663 = vunpack.c.h.b16 %v317
    %v664 = vunpack.c.l.b16 %v318
    %v665 = vunpack.c.h.b16 %v318
    %v666 = vunpack.c.l.b16 %v319
    %v667 = vunpack.c.h.b16 %v319
    %v668 = vunpack.c.l.b16 %v320
    %v669 = vunpack.c.h.b16 %v320
    %v670 = vunpack.c.l.b16 %v321
    %v671 = vunpack.c.h.b16 %v321
    %v672 = vunpack.c.l.b16 %v322
    %v673 = vunpack.c.h.b16 %v322
    %v674 = vunpack.c.l.b16 %v323
    %v675 = vunpack.c.h.b16 %v323
    %v676 = vunpack.c.l.b16 %v324
    %v677 = vunpack.c.h.b16 %v324
    %v678 = vunpack.c.l.b16 %v325
    %v679 = vunpack.c.h.b16 %v325
    %v680 = vunpack.c.l.b16 %v326
    %v681 = vunpack.c.h.b16 %v326
    %v682 = vunpack.c.l.b16 %v327
    %v683 = vunpack.c.h.b16 %v327
    %v684 = vunpack.c.l.b16 %v328
    %v685 = vunpack.c.h.b16 %v328
    %v686 = vunpack.c.l.b16 %v329
    %v687 = vunpack.c.h.b16 %v329
    %v688 = vunpack.c.l.b16 %v330
    %v689 = vunpack.c.h.b16 %v330
    %v690 = vunpack.c.l.b16 %v331
    %v691 = vunpack.c.h.b16 %v331
    %v692 = vunpack.c.l.b16 %v332
    %v693 = vunpack.c.h.b16 %v332
    %v694 = vunpack.c.l.b16 %v333
    %v695 = vunpack.c.h.b16 %v333
    %v696 = vunpack.c.l.b16 %v334
    %v697 = vunpack.c.h.b16 %v334
    %v698 = vunpack.c.l.b16 %v335
    %v699 = vunpack.c.h.b16 %v335
    %v700 = vunpack.c.l.b16 %v336
    %v701 = vunpack.c.h.b16 %v336
    %v702 = vunpack.c.l.b16 %v337
    %v703 = vunpack.c.h.b16 %v337
    %v704 = vunpack.c.l.b16 %v338
    %v705 = vunpack.c.h.b16 %v338
    %v706 = vunpack.c.l.b16 %v339
    %v707 = vunpack.c.h.b16 %v339
    %v708 = vunpack.c.l.b16 %v340
    %v709 = vunpack.c.h.b16 %v340
    %v710 = vunpack.c.l.b16 %v341
    %v711 = vunpack.c.h.b16 %v341
    %v712 = vunpack.c.l.b16 %v342
    %v713 = vunpack.c.h.b16 %v342
    %v714 = vunpack.c.l.b16 %v343
    %v715 = vunpack.c.h.b16 %v343
    %v716 = vunpack.c.l.b16 %v344
    %v717 = vunpack.c.h.b16 %v344
    %v718 = vunpack.c.l.b16 %v345
    %v719 = vunpack.c.h.b16 %v345
    %v720 = vunpack.c.l.b16 %v346
    %v721 = vunpack.c.h.b16 %v346
    %v722 = vunpack.c.l.b16 %v347
    %v723 = vunpack.c.h.b16 %v347
    %v724 = vunpack.c.l.b16 %v348
    %v725 = vunpack.c.h.b16 %v348
    %v726 = vunpack.c.l.b16 %v349
    %v727 = vunpack.c.h.b16 %v349
    %v728 = vunpack.c.l.b16 %v350
    %v729 = vunpack.c.h.b16 %v350
    %v730 = vunpack.c.l.b16 %v351
    %v731 = vunpack.c.h.b16 %v351
    %v732 = vunpack.c.l.b16 %v352
    %v733 = vunpack.c.h.b16 %v352
    %v734 = vunpack.c.l.b16 %v353
    %v735 = vunpack.c.h.b16 %v353
    %v736 = vunpack.c.l.b16 %v354
    %v737 = vunpack.c.h.b16 %v354
    %v738 = vunpack.c.l.b16 %v355
    %v739 = vunpack.c.h.b16 %v355
    %v740 = vunpack.c.l.b16 %v356
    %v741 = vunpack.c.h.b16 %v356
    %v742 = vunpack.c.l.b16 %v357
    %v743 = vunpack.c.h.b16 %v357
    %v744 = vunpack.c.l.b16 %v358
    %v745 = vunpack.c.h.b16 %v358
    %v746 = vunpack.c.l.b16 %v359
    %v747 = vunpack.c.h.b16 %v359
    %v748 = vunpack.c.l.b16 %v360
    %v749 = vunpack.c.h.b16 %v360
    %v750 = vunpack.c.l.b16 %v361
    %v751 = vunpack.c.h.b16 %v361
    %v752 = vunpack.c.l.b16 %v362
    %v753 = vunpack.c.h.b16 %v362
    %v754 = vunpack.c.l.b16 %v363
    %v755 = vunpack.c.h.b16 %v363
    %v756 = vunpack.c.l.b16 %v364
    %v757 = vunpack.c.h.b16 %v364
    %v758 = vunpack.c.l.b16 %v365
    %v759 = vunpack.c.h.b16 %v365
    %v760 = vunpack.c.l.b16 %v366
    %v761 = vunpack.c.h.b16 %v366
    %v762 = vunpack.c.l.b16 %v367
    %v763 = vunpack.c.h.b16 %v367
    %v764 = vunpack.c.l.b16 %v368
    %v765 = vunpack.c.h.b16 %v368
    %v766 = vunpack.c.l.b16 %v369
    %v767 = vunpack.c.h.b16 %v369
    %v768 = vunpack.c.l.b16 %v370
    %v769 = vunpack.c.h.b16 %v370
    %v770 = vunpack.c.l.b16 %v371
    %v771 = vunpack.c.h.b16 %v371
    %v772 = vunpack.c.l.b16 %v372
    %v773 = vunpack.c.h.b16 %v372
    %v774 = vunpack.c.l.b16 %v373
    %v775 = vunpack.c.h.b16 %v373
    %v776 = vunpack.c.l.b16 %v374
    %v777 = vunpack.c.h.b16 %v374
    %v778 = vunpack.c.l.b16 %v375
    %v779 = vunpack.c.h.b16 %v375
    %v780 = vunpack.c.l.b16 %v376
    %v781 = vunpack.c.h.b16 %v376
    %v782 = vpack.c.b16 %v530, %v526
    %v783 = vpack.c.b16 %v531, %v527
    %v784 = vpack.c.b16 %v532, %v528
    %v785 = vpack.c.b16 %v533, %v529
    %v786 = vpack.c.b16 %v538, %v534
    %v787 = vpack.c.b16 %v539, %v535
    %v788 = vpack.c.b16 %v540, %v536
    %v789 = vpack.c.b16 %v541, %v537
    %v790 = vpack.c.b16 %v546, %v542
    %v791 = vpack.c.b16 %v547, %v543
    %v792 = vpack.c.b16 %v548, %v544
    %v793 = vpack.c.b16 %v549, %v545
    %v794 = vpack.c.b16 %v554, %v550
    %v795 = vpack.c.b16 %v555, %v551
    %v796 = vpack.c.b16 %v556, %v552
    %v797 = vpack.c.b16 %v557, %v553
    %v798 = vpack.c.b16 %v562, %v558
    %v799 = vpack.c.b16 %v563, %v559
    %v800 = vpack.c.b16 %v564, %v560
    %v801 = vpack.c.b16 %v565, %v561
    %v802 = vpack.c.b16 %v570, %v566
    %v803 = vpack.c.b16 %v571, %v567
    %v804 = vpack.c.b16 %v572, %v568
    %v805 = vpack.c.b16 %v573, %v569
    %v806 = vpack.c.b16 %v578, %v574
    %v807 = vpack.c.b16 %v579, %v575
    %v808 = vpack.c.b16 %v580, %v576
    %v809 = vpack.c.b16 %v581, %v577
    %v810 = vpack.c.b16 %v586, %v582
    %v811 = vpack.c.b16 %v587, %v583
    %v812 = vpack.c.b16 %v588, %v584
    %v813 = vpack.c.b16 %v589, %v585
    %v814 = vpack.c.b16 %v594, %v590
    %v815 = vpack.c.b16 %v595, %v591
    %v816 = vpack.c.b16 %v596, %v592
    %v817 = vpack.c.b16 %v597, %v593
    %v818 = vpack.c.b16 %v602, %v598
    %v819 = vpack.c.b16 %v603, %v599
    %v820 = vpack.c.b16 %v604, %v600
    %v821 = vpack.c.b16 %v605, %v601
    %v822 = vpack.c.b16 %v610, %v606
    %v823 = vpack.c.b16 %v611, %v607
    %v824 = vpack.c.b16 %v612, %v608
    %v825 = vpack.c.b16 %v613, %v609
    %v826 = vpack.c.b16 %v618, %v614
    %v827 = vpack.c.b16 %v619, %v615
    %v828 = vpack.c.b16 %v620, %v616
    %v829 = vpack.c.b16 %v621, %v617
    %v830 = vpack.c.b16 %v626, %v622
    %v831 = vpack.c.b16 %v627, %v623
    %v832 = vpack.c.b16 %v628, %v624
    %v833 = vpack.c.b16 %v629, %v625
    %v834 = vpack.c.b16 %v634, %v630
    %v835 = vpack.c.b16 %v635, %v631
    %v836 = vpack.c.b16 %v636, %v632
    %v837 = vpack.c.b16 %v637, %v633
    %v838 = vpack.c.b16 %v642, %v638
    %v839 = vpack.c.b16 %v643, %v639
    %v840 = vpack.c.b16 %v644, %v640
    %v841 = vpack.c.b16 %v645, %v641
    %v842 = vpack.c.b16 %v650, %v646
    %v843 = vpack.c.b16 %v651, %v647
    %v844 = vpack.c.b16 %v652, %v648
    %v845 = vpack.c.b16 %v653, %v649
    %v846 = vpack.c.b16 %v658, %v654
    %v847 = vpack.c.b16 %v659, %v655
    %v848 = vpack.c.b16 %v660, %v656
    %v849 = vpack.c.b16 %v661, %v657
    %v850 = vpack.c.b16 %v666, %v662
    %v851 = vpack.c.b16 %v667, %v663
    %v852 = vpack.c.b16 %v668, %v664
    %v853 = vpack.c.b16 %v669, %v665
    %v854 = vpack.c.b16 %v674, %v670
    %v855 = vpack.c.b16 %v675, %v671
    %v856 = vpack.c.b16 %v676, %v672
    %v857 = vpack.c.b16 %v677, %v673
    %v858 = vpack.c.b16 %v682, %v678
    %v859 = vpack.c.b16 %v683, %v679
    %v860 = vpack.c.b16 %v684, %v680
    %v861 = vpack.c.b16 %v685, %v681
    %v862 = vpack.c.b16 %v690, %v686
    %v863 = vpack.c.b16 %v691, %v687
    %v864 = vpack.c.b16 %v692, %v688
    %v865 = vpack.c.b16 %v693, %v689
    %v866 = vpack.c.b16 %v698, %v694
    %v867 = vpack.c.b16 %v699, %v695
    %v868 = vpack.c.b16 %v700, %v696
    %v869 = vpack.c.b16 %v701, %v697
    %v870 = vpack.c.b16 %v706, %v702
    %v871 = vpack.c.b16 %v707, %v703
    %v872 = vpack.c.b16 %v708, %v704
    %v873 = vpack.c.b16 %v709, %v705
    %v874 = vpack.c.b16 %v714, %v710
    %v875 = vpack.c.b16 %v715, %v711
    %v876 = vpack.c.b16 %v716, %v712
    %v877 = vpack.c.b16 %v717, %v713
    %v878 = vpack.c.b16 %v722, %v718
    %v879 = vpack.c.b16 %v723, %v719
    %v880 = vpack.c.b16 %v724, %v720
    %v881 = vpack.c.b16 %v725, %v721
    %v882 = vpack.c.b16 %v730, %v726
    %v883 = vpack.c.b16 %v731, %v727
    %v884 = vpack.c.b16 %v732, %v728
    %v885 = vpack.c.b16 %v733, %v729
    %v886 = vpack.c.b16 %v738, %v734
    %v887 = vpack.c.b16 %v739, %v735
    %v888 = vpack.c.b16 %v740, %v736
    %v889 = vpack.c.b16 %v741, %v737
    %v890 = vpack.c.b16 %v746, %v742
    %v891 = vpack.c.b16 %v747, %v743
    %v892 = vpack.c.b16 %v748, %v744
    %v893 = vpack.c.b16 %v749, %v745
    %v894 = vpack.c.b16 %v754, %v750
    %v895 = vpack.c.b16 %v755, %v751
    %v896 = vpack.c.b16 %v756, %v752
    %v897 = vpack.c.b16 %v757, %v753
    %v898 = vpack.c.b16 %v762, %v758
    %v899 = vpack.c.b16 %v763, %v759
    %v900 = vpack.c.b16 %v764, %v760
    %v901 = vpack.c.b16 %v765, %v761
    %v902 = vpack.c.b16 %v770, %v766
    %v903 = vpack.c.b16 %v771, %v767
    %v904 = vpack.c.b16 %v772, %v768
    %v905 = vpack.c.b16 %v773, %v769
    %v906 = vpack.c.b16 %v778, %v774
    %v907 = vpack.c.b16 %v779, %v775
    %v908 = vpack.c.b16 %v780, %v776
    %v909 = vpack.c.b16 %v781, %v777
    %1038 = vmatprep.subr.bf16.mxu0 %v783
    %1039 = vmatpush1.bf16.msra.mxu0 %v782
    %1040 = vmatprep.subr.bf16.mxu0 %v787
    %1041 = vmatpush1.bf16.msra.mxu0 %v786
    %1042 = vmatprep.subr.bf16.mxu0 %v791
    %1043 = vmatpush1.bf16.msra.mxu0 %v790
    %1044 = vmatprep.subr.bf16.mxu0 %v795
    %1045 = vmatpush1.bf16.msra.mxu0 %v794
    %1046 = vmatprep.subr.bf16.mxu0 %v799
    %1047 = vmatpush1.bf16.msra.mxu0 %v798
    %1048 = vmatprep.subr.bf16.mxu0 %v803
    %1049 = vmatpush1.bf16.msra.mxu0 %v802
    %1050 = vmatprep.subr.bf16.mxu0 %v807
    %1051 = vmatpush1.bf16.msra.mxu0 %v806
    %1052 = vmatprep.subr.bf16.mxu0 %v811
    %1053 = vmatpush1.bf16.msra.mxu0 %v810
    %1054 = vmatprep.subr.bf16.mxu0 %v815
    %1055 = vmatpush1.bf16.msra.mxu0 %v814
    %1056 = vmatprep.subr.bf16.mxu0 %v819
    %1057 = vmatpush1.bf16.msra.mxu0 %v818
    %1058 = vmatprep.subr.bf16.mxu0 %v823
    %1059 = vmatpush1.bf16.msra.mxu0 %v822
    %1060 = vmatprep.subr.bf16.mxu0 %v827
    %1061 = vmatpush1.bf16.msra.mxu0 %v826
    %1062 = vmatprep.subr.bf16.mxu0 %v831
    %1063 = vmatpush1.bf16.msra.mxu0 %v830
    %1064 = vmatprep.subr.bf16.mxu0 %v835
    %1065 = vmatpush1.bf16.msra.mxu0 %v834
    %1066 = vmatprep.subr.bf16.mxu0 %v839
    %1067 = vmatpush1.bf16.msra.mxu0 %v838
    %1068 = vmatprep.subr.bf16.mxu0 %v843
    %1069 = vmatpush1.bf16.msra.mxu0 %v842
    %1070 = vmatprep.mubr.bf16.mxu0 %v246
    %1071 = vmatmul.mubr.bf16.gmra.mrb[0].mxu0 %v245
    %v1072 = vpop.f32.mrb[0].mxu0
    %v1073 = vadd.f32 %v381, %v1072
    %v1074 = vpop.f32.mrb[0].mxu0
    %v1075 = vadd.f32 %v385, %v1074
    %v1076 = vpop.f32.mrb[0].mxu0
    %v1077 = vpop.f32.mrb[0].mxu0
    %1078 = vdwg.mxu0
    %1079 = vmatprep.subr.bf16.mxu0 %v847
    %1080 = vmatpush1.bf16.msra.mxu0 %v846
    %1081 = vmatprep.subr.bf16.mxu0 %v851
    %1082 = vmatpush1.bf16.msra.mxu0 %v850
    %1083 = vmatprep.subr.bf16.mxu0 %v855
    %1084 = vmatpush1.bf16.msra.mxu0 %v854
    %1085 = vmatprep.subr.bf16.mxu0 %v859
    %1086 = vmatpush1.bf16.msra.mxu0 %v858
    %1087 = vmatprep.subr.bf16.mxu0 %v863
    %1088 = vmatpush1.bf16.msra.mxu0 %v862
    %1089 = vmatprep.subr.bf16.mxu0 %v867
    %1090 = vmatpush1.bf16.msra.mxu0 %v866
    %1091 = vmatprep.subr.bf16.mxu0 %v871
    %1092 = vmatpush1.bf16.msra.mxu0 %v870
    %1093 = vmatprep.subr.bf16.mxu0 %v875
    %1094 = vmatpush1.bf16.msra.mxu0 %v874
    %1095 = vmatprep.subr.bf16.mxu0 %v879
    %1096 = vmatpush1.bf16.msra.mxu0 %v878
    %1097 = vmatprep.subr.bf16.mxu0 %v883
    %1098 = vmatpush1.bf16.msra.mxu0 %v882
    %1099 = vmatprep.subr.bf16.mxu0 %v887
    %1100 = vmatpush1.bf16.msra.mxu0 %v886
    %1101 = vmatprep.subr.bf16.mxu0 %v891
    %1102 = vmatpush1.bf16.msra.mxu0 %v890
    %1103 = vmatprep.subr.bf16.mxu0 %v895
    %1104 = vmatpush1.bf16.msra.mxu0 %v894
    %1105 = vmatprep.subr.bf16.mxu0 %v899
    %1106 = vmatpush1.bf16.msra.mxu0 %v898
    %1107 = vmatprep.subr.bf16.mxu0 %v903
    %1108 = vmatpush1.bf16.msra.mxu0 %v902
    %1109 = vmatprep.subr.bf16.mxu0 %v907
    %1110 = vmatpush1.bf16.msra.mxu0 %v906
    %1111 = vmatprep.mubr.bf16.mxu0 %v248
    %1112 = vmatmul.mubr.bf16.gmra.mrb[0].mxu0 %v247
    %v1113 = vpop.f32.mrb[0].mxu0
    %v1114 = vadd.f32 %v1073, %v1113
    %v1115 = vpop.f32.mrb[0].mxu0
    %v1116 = vadd.f32 %v1075, %v1115
    %v1117 = vpop.f32.mrb[0].mxu0
    %v1118 = vpop.f32.mrb[0].mxu0
    %1119 = vdwg.mxu0
    %1120 = vmatprep.subr.bf16.mxu0 %v785
    %1121 = vmatpush1.bf16.msra.mxu0 %v784
    %1122 = vmatprep.subr.bf16.mxu0 %v789
    %1123 = vmatpush1.bf16.msra.mxu0 %v788
    %1124 = vmatprep.subr.bf16.mxu0 %v793
    %1125 = vmatpush1.bf16.msra.mxu0 %v792
    %1126 = vmatprep.subr.bf16.mxu0 %v797
    %1127 = vmatpush1.bf16.msra.mxu0 %v796
    %1128 = vmatprep.subr.bf16.mxu0 %v801
    %1129 = vmatpush1.bf16.msra.mxu0 %v800
    %1130 = vmatprep.subr.bf16.mxu0 %v805
    %1131 = vmatpush1.bf16.msra.mxu0 %v804
    %1132 = vmatprep.subr.bf16.mxu0 %v809
    %1133 = vmatpush1.bf16.msra.mxu0 %v808
    %1134 = vmatprep.subr.bf16.mxu0 %v813
    %1135 = vmatpush1.bf16.msra.mxu0 %v812
    %1136 = vmatprep.subr.bf16.mxu0 %v817
    %1137 = vmatpush1.bf16.msra.mxu0 %v816
    %1138 = vmatprep.subr.bf16.mxu0 %v821
    %1139 = vmatpush1.bf16.msra.mxu0 %v820
    %1140 = vmatprep.subr.bf16.mxu0 %v825
    %1141 = vmatpush1.bf16.msra.mxu0 %v824
    %1142 = vmatprep.subr.bf16.mxu0 %v829
    %1143 = vmatpush1.bf16.msra.mxu0 %v828
    %1144 = vmatprep.subr.bf16.mxu0 %v833
    %1145 = vmatpush1.bf16.msra.mxu0 %v832
    %1146 = vmatprep.subr.bf16.mxu0 %v837
    %1147 = vmatpush1.bf16.msra.mxu0 %v836
    %1148 = vmatprep.subr.bf16.mxu0 %v841
    %1149 = vmatpush1.bf16.msra.mxu0 %v840
    %1150 = vmatprep.subr.bf16.mxu0 %v845
    %1151 = vmatpush1.bf16.msra.mxu0 %v844
    %1152 = vmatprep.mubr.bf16.mxu0 %v246
    %1153 = vmatmul.mubr.bf16.gmra.mrb[0].mxu0 %v245
    %v1154 = vpop.f32.mrb[0].mxu0
    %v1155 = vadd.f32 %v389, %v1154
    %v1156 = vpop.f32.mrb[0].mxu0
    %v1157 = vadd.f32 %v393, %v1156
    %v1158 = vpop.f32.mrb[0].mxu0
    %v1159 = vpop.f32.mrb[0].mxu0
    %1160 = vdwg.mxu0
    %1161 = vmatprep.subr.bf16.mxu0 %v849
    %1162 = vmatpush1.bf16.msra.mxu0 %v848
    %1163 = vmatprep.subr.bf16.mxu0 %v853
    %1164 = vmatpush1.bf16.msra.mxu0 %v852
    %1165 = vmatprep.subr.bf16.mxu0 %v857
    %1166 = vmatpush1.bf16.msra.mxu0 %v856
    %1167 = vmatprep.subr.bf16.mxu0 %v861
    %1168 = vmatpush1.bf16.msra.mxu0 %v860
    %1169 = vmatprep.subr.bf16.mxu0 %v865
    %1170 = vmatpush1.bf16.msra.mxu0 %v864
    %1171 = vmatprep.subr.bf16.mxu0 %v869
    %1172 = vmatpush1.bf16.msra.mxu0 %v868
    %1173 = vmatprep.subr.bf16.mxu0 %v873
    %1174 = vmatpush1.bf16.msra.mxu0 %v872
    %1175 = vmatprep.subr.bf16.mxu0 %v877
    %1176 = vmatpush1.bf16.msra.mxu0 %v876
    %1177 = vmatprep.subr.bf16.mxu0 %v881
    %1178 = vmatpush1.bf16.msra.mxu0 %v880
    %1179 = vmatprep.subr.bf16.mxu0 %v885
    %1180 = vmatpush1.bf16.msra.mxu0 %v884
    %1181 = vmatprep.subr.bf16.mxu0 %v889
    %1182 = vmatpush1.bf16.msra.mxu0 %v888
    %1183 = vmatprep.subr.bf16.mxu0 %v893
    %1184 = vmatpush1.bf16.msra.mxu0 %v892
    %1185 = vmatprep.subr.bf16.mxu0 %v897
    %1186 = vmatpush1.bf16.msra.mxu0 %v896
    %1187 = vmatprep.subr.bf16.mxu0 %v901
    %1188 = vmatpush1.bf16.msra.mxu0 %v900
    %1189 = vmatprep.subr.bf16.mxu0 %v905
    %1190 = vmatpush1.bf16.msra.mxu0 %v904
    %1191 = vmatprep.subr.bf16.mxu0 %v909
    %1192 = vmatpush1.bf16.msra.mxu0 %v908
    %1193 = vmatprep.mubr.bf16.mxu0 %v248
    %1194 = vmatmul.mubr.bf16.gmra.mrb[0].mxu0 %v247
    %v1195 = vpop.f32.mrb[0].mxu0
    %v1196 = vadd.f32 %v1155, %v1195
    %v1197 = vpop.f32.mrb[0].mxu0
    %v1198 = vadd.f32 %v1157, %v1197
    %v1199 = vpop.f32.mrb[0].mxu0
    %v1200 = vpop.f32.mrb[0].mxu0
    %1201 = vdwg.mxu0
    %v1202 = vmax.f32 %v1114, 0.0
    %v1203 = vmax.f32 %v1116, 0.0
    %v1204 = vmax.f32 %v1196, 0.0
    %v1205 = vmax.f32 %v1198, 0.0
    %v1206 = vpack.c.bf16 %v1202, %v1202
    %v1207 = vpack.c.bf16 %v1203, %v1203
    %v1208 = vpack.c.bf16 %v1204, %v1204
    %v1209 = vpack.c.bf16 %v1205, %v1205
    %1210 = vmatprep.subr.bf16.mxu0 %v783
    %1211 = vmatpush1.bf16.msra.mxu0 %v782
    %1212 = vmatprep.subr.bf16.mxu0 %v787
    %1213 = vmatpush1.bf16.msra.mxu0 %v786
    %1214 = vmatprep.subr.bf16.mxu0 %v791
    %1215 = vmatpush1.bf16.msra.mxu0 %v790
    %1216 = vmatprep.subr.bf16.mxu0 %v795
    %1217 = vmatpush1.bf16.msra.mxu0 %v794
    %1218 = vmatprep.subr.bf16.mxu0 %v799
    %1219 = vmatpush1.bf16.msra.mxu0 %v798
    %1220 = vmatprep.subr.bf16.mxu0 %v803
    %1221 = vmatpush1.bf16.msra.mxu0 %v802
    %1222 = vmatprep.subr.bf16.mxu0 %v807
    %1223 = vmatpush1.bf16.msra.mxu0 %v806
    %1224 = vmatprep.subr.bf16.mxu0 %v811
    %1225 = vmatpush1.bf16.msra.mxu0 %v810
    %1226 = vmatprep.subr.bf16.mxu0 %v815
    %1227 = vmatpush1.bf16.msra.mxu0 %v814
    %1228 = vmatprep.subr.bf16.mxu0 %v819
    %1229 = vmatpush1.bf16.msra.mxu0 %v818
    %1230 = vmatprep.subr.bf16.mxu0 %v823
    %1231 = vmatpush1.bf16.msra.mxu0 %v822
    %1232 = vmatprep.subr.bf16.mxu0 %v827
    %1233 = vmatpush1.bf16.msra.mxu0 %v826
    %1234 = vmatprep.subr.bf16.mxu0 %v831
    %1235 = vmatpush1.bf16.msra.mxu0 %v830
    %1236 = vmatprep.subr.bf16.mxu0 %v835
    %1237 = vmatpush1.bf16.msra.mxu0 %v834
    %1238 = vmatprep.subr.bf16.mxu0 %v839
    %1239 = vmatpush1.bf16.msra.mxu0 %v838
    %1240 = vmatprep.subr.bf16.mxu0 %v843
    %1241 = vmatpush1.bf16.msra.mxu0 %v842
    %1242 = vmatprep.mubr.bf16.mxu0 %v1207
    %1243 = vmatmul.mubr.bf16.gmra.mrb[0].mxu0 %v1206
    %v1244 = vpop.f32.mrb[0].mxu0
    %v1245 = vadd.f32 %v381, %v1244
    %v1246 = vpop.f32.mrb[0].mxu0
    %v1247 = vadd.f32 %v385, %v1246
    %v1248 = vpop.f32.mrb[0].mxu0
    %v1249 = vpop.f32.mrb[0].mxu0
    %1250 = vdwg.mxu0
    %1251 = vmatprep.subr.bf16.mxu0 %v847
    %1252 = vmatpush1.bf16.msra.mxu0 %v846
    %1253 = vmatprep.subr.bf16.mxu0 %v851
    %1254 = vmatpush1.bf16.msra.mxu0 %v850
    %1255 = vmatprep.subr.bf16.mxu0 %v855
    %1256 = vmatpush1.bf16.msra.mxu0 %v854
    %1257 = vmatprep.subr.bf16.mxu0 %v859
    %1258 = vmatpush1.bf16.msra.mxu0 %v858
    %1259 = vmatprep.subr.bf16.mxu0 %v863
    %1260 = vmatpush1.bf16.msra.mxu0 %v862
    %1261 = vmatprep.subr.bf16.mxu0 %v867
    %1262 = vmatpush1.bf16.msra.mxu0 %v866
    %1263 = vmatprep.subr.bf16.mxu0 %v871
    %1264 = vmatpush1.bf16.msra.mxu0 %v870
    %1265 = vmatprep.subr.bf16.mxu0 %v875
    %1266 = vmatpush1.bf16.msra.mxu0 %v874
    %1267 = vmatprep.subr.bf16.mxu0 %v879
    %1268 = vmatpush1.bf16.msra.mxu0 %v878
    %1269 = vmatprep.subr.bf16.mxu0 %v883
    %1270 = vmatpush1.bf16.msra.mxu0 %v882
    %1271 = vmatprep.subr.bf16.mxu0 %v887
    %1272 = vmatpush1.bf16.msra.mxu0 %v886
    %1273 = vmatprep.subr.bf16.mxu0 %v891
    %1274 = vmatpush1.bf16.msra.mxu0 %v890
    %1275 = vmatprep.subr.bf16.mxu0 %v895
    %1276 = vmatpush1.bf16.msra.mxu0 %v894
    %1277 = vmatprep.subr.bf16.mxu0 %v899
    %1278 = vmatpush1.bf16.msra.mxu0 %v898
    %1279 = vmatprep.subr.bf16.mxu0 %v903
    %1280 = vmatpush1.bf16.msra.mxu0 %v902
    %1281 = vmatprep.subr.bf16.mxu0 %v907
    %1282 = vmatpush1.bf16.msra.mxu0 %v906
    %1283 = vmatprep.mubr.bf16.mxu0 %v1209
    %1284 = vmatmul.mubr.bf16.gmra.mrb[0].mxu0 %v1208
    %v1285 = vpop.f32.mrb[0].mxu0
    %v1286 = vadd.f32 %v1245, %v1285
    %v1287 = vpop.f32.mrb[0].mxu0
    %v1288 = vadd.f32 %v1247, %v1287
    %v1289 = vpop.f32.mrb[0].mxu0
    %v1290 = vpop.f32.mrb[0].mxu0
    %1291 = vdwg.mxu0
    %1292 = vmatprep.subr.bf16.mxu0 %v785
    %1293 = vmatpush1.bf16.msra.mxu0 %v784
    %1294 = vmatprep.subr.bf16.mxu0 %v789
    %1295 = vmatpush1.bf16.msra.mxu0 %v788
    %1296 = vmatprep.subr.bf16.mxu0 %v793
    %1297 = vmatpush1.bf16.msra.mxu0 %v792
    %1298 = vmatprep.subr.bf16.mxu0 %v797
    %1299 = vmatpush1.bf16.msra.mxu0 %v796
    %1300 = vmatprep.subr.bf16.mxu0 %v801
    %1301 = vmatpush1.bf16.msra.mxu0 %v800
    %1302 = vmatprep.subr.bf16.mxu0 %v805
    %1303 = vmatpush1.bf16.msra.mxu0 %v804
    %1304 = vmatprep.subr.bf16.mxu0 %v809
    %1305 = vmatpush1.bf16.msra.mxu0 %v808
    %1306 = vmatprep.subr.bf16.mxu0 %v813
    %1307 = vmatpush1.bf16.msra.mxu0 %v812
    %1308 = vmatprep.subr.bf16.mxu0 %v817
    %1309 = vmatpush1.bf16.msra.mxu0 %v816
    %1310 = vmatprep.subr.bf16.mxu0 %v821
    %1311 = vmatpush1.bf16.msra.mxu0 %v820
    %1312 = vmatprep.subr.bf16.mxu0 %v825
    %1313 = vmatpush1.bf16.msra.mxu0 %v824
    %1314 = vmatprep.subr.bf16.mxu0 %v829
    %1315 = vmatpush1.bf16.msra.mxu0 %v828
    %1316 = vmatprep.subr.bf16.mxu0 %v833
    %1317 = vmatpush1.bf16.msra.mxu0 %v832
    %1318 = vmatprep.subr.bf16.mxu0 %v837
    %1319 = vmatpush1.bf16.msra.mxu0 %v836
    %1320 = vmatprep.subr.bf16.mxu0 %v841
    %1321 = vmatpush1.bf16.msra.mxu0 %v840
    %1322 = vmatprep.subr.bf16.mxu0 %v845
    %1323 = vmatpush1.bf16.msra.mxu0 %v844
    %1324 = vmatprep.mubr.bf16.mxu0 %v1207
    %1325 = vmatmul.mubr.bf16.gmra.mrb[0].mxu0 %v1206
    %v1326 = vpop.f32.mrb[0].mxu0
    %v1327 = vadd.f32 %v389, %v1326
    %v1328 = vpop.f32.mrb[0].mxu0
    %v1329 = vadd.f32 %v393, %v1328
    %v1330 = vpop.f32.mrb[0].mxu0
    %v1331 = vpop.f32.mrb[0].mxu0
    %1332 = vdwg.mxu0
    %1333 = vmatprep.subr.bf16.mxu0 %v849
    %1334 = vmatpush1.bf16.msra.mxu0 %v848
    %1335 = vmatprep.subr.bf16.mxu0 %v853
    %1336 = vmatpush1.bf16.msra.mxu0 %v852
    %1337 = vmatprep.subr.bf16.mxu0 %v857
    %1338 = vmatpush1.bf16.msra.mxu0 %v856
    %1339 = vmatprep.subr.bf16.mxu0 %v861
    %1340 = vmatpush1.bf16.msra.mxu0 %v860
    %1341 = vmatprep.subr.bf16.mxu0 %v865
    %1342 = vmatpush1.bf16.msra.mxu0 %v864
    %1343 = vmatprep.subr.bf16.mxu0 %v869
    %1344 = vmatpush1.bf16.msra.mxu0 %v868
    %1345 = vmatprep.subr.bf16.mxu0 %v873
    %1346 = vmatpush1.bf16.msra.mxu0 %v872
    %1347 = vmatprep.subr.bf16.mxu0 %v877
    %1348 = vmatpush1.bf16.msra.mxu0 %v876
    %1349 = vmatprep.subr.bf16.mxu0 %v881
    %1350 = vmatpush1.bf16.msra.mxu0 %v880
    %1351 = vmatprep.subr.bf16.mxu0 %v885
    %1352 = vmatpush1.bf16.msra.mxu0 %v884
    %1353 = vmatprep.subr.bf16.mxu0 %v889
    %1354 = vmatpush1.bf16.msra.mxu0 %v888
    %1355 = vmatprep.subr.bf16.mxu0 %v893
    %1356 = vmatpush1.bf16.msra.mxu0 %v892
    %1357 = vmatprep.subr.bf16.mxu0 %v897
    %1358 = vmatpush1.bf16.msra.mxu0 %v896
    %1359 = vmatprep.subr.bf16.mxu0 %v901
    %1360 = vmatpush1.bf16.msra.mxu0 %v900
    %1361 = vmatprep.subr.bf16.mxu0 %v905
    %1362 = vmatpush1.bf16.msra.mxu0 %v904
    %1363 = vmatprep.subr.bf16.mxu0 %v909
    %1364 = vmatpush1.bf16.msra.mxu0 %v908
    %1365 = vmatprep.mubr.bf16.mxu0 %v1209
    %1366 = vmatmul.mubr.bf16.gmra.mrb[0].mxu0 %v1208
    %v1367 = vpop.f32.mrb[0].mxu0
    %v1368 = vadd.f32 %v1327, %v1367
    %v1369 = vpop.f32.mrb[0].mxu0
    %v1370 = vadd.f32 %v1329, %v1369
    %v1371 = vpop.f32.mrb[0].mxu0
    %v1372 = vpop.f32.mrb[0].mxu0
    %1373 = vdwg.mxu0
    %v1374 = vmax.f32 %v1286, 0.0
    %v1375 = vmax.f32 %v1288, 0.0
    %v1376 = vmax.f32 %v1368, 0.0
    %v1377 = vmax.f32 %v1370, 0.0
    %v1378 = vpack.c.bf16 %v1374, %v1374
    %v1379 = vpack.c.bf16 %v1375, %v1375
    %v1380 = vpack.c.bf16 %v1376, %v1376
    %v1381 = vpack.c.bf16 %v1377, %v1377
    %1382 = vmatprep.subr.bf16.mxu0 %v783
    %1383 = vmatpush1.bf16.msra.mxu0 %v782
    %1384 = vmatprep.subr.bf16.mxu0 %v787
    %1385 = vmatpush1.bf16.msra.mxu0 %v786
    %1386 = vmatprep.subr.bf16.mxu0 %v791
    %1387 = vmatpush1.bf16.msra.mxu0 %v790
    %1388 = vmatprep.subr.bf16.mxu0 %v795
    %1389 = vmatpush1.bf16.msra.mxu0 %v794
    %1390 = vmatprep.subr.bf16.mxu0 %v799
    %1391 = vmatpush1.bf16.msra.mxu0 %v798
    %1392 = vmatprep.subr.bf16.mxu0 %v803
    %1393 = vmatpush1.bf16.msra.mxu0 %v802
    %1394 = vmatprep.subr.bf16.mxu0 %v807
    %1395 = vmatpush1.bf16.msra.mxu0 %v806
    %1396 = vmatprep.subr.bf16.mxu0 %v811
    %1397 = vmatpush1.bf16.msra.mxu0 %v810
    %1398 = vmatprep.subr.bf16.mxu0 %v815
    %1399 = vmatpush1.bf16.msra.mxu0 %v814
    %1400 = vmatprep.subr.bf16.mxu0 %v819
    %1401 = vmatpush1.bf16.msra.mxu0 %v818
    %1402 = vmatprep.subr.bf16.mxu0 %v823
    %1403 = vmatpush1.bf16.msra.mxu0 %v822
    %1404 = vmatprep.subr.bf16.mxu0 %v827
    %1405 = vmatpush1.bf16.msra.mxu0 %v826
    %1406 = vmatprep.subr.bf16.mxu0 %v831
    %1407 = vmatpush1.bf16.msra.mxu0 %v830
    %1408 = vmatprep.subr.bf16.mxu0 %v835
    %1409 = vmatpush1.bf16.msra.mxu0 %v834
    %1410 = vmatprep.subr.bf16.mxu0 %v839
    %1411 = vmatpush1.bf16.msra.mxu0 %v838
    %1412 = vmatprep.subr.bf16.mxu0 %v843
    %1413 = vmatpush1.bf16.msra.mxu0 %v842
    %1414 = vmatprep.mubr.bf16.mxu0 %v1379
    %1415 = vmatmul.mubr.bf16.gmra.mrb[0].mxu0 %v1378
    %v1416 = vpop.f32.mrb[0].mxu0
    %v1417 = vadd.f32 %v381, %v1416
    %v1418 = vpop.f32.mrb[0].mxu0
    %v1419 = vadd.f32 %v385, %v1418
    %v1420 = vpop.f32.mrb[0].mxu0
    %v1421 = vpop.f32.mrb[0].mxu0
    %1422 = vdwg.mxu0
    %1423 = vmatprep.subr.bf16.mxu0 %v847
    %1424 = vmatpush1.bf16.msra.mxu0 %v846
    %1425 = vmatprep.subr.bf16.mxu0 %v851
    %1426 = vmatpush1.bf16.msra.mxu0 %v850
    %1427 = vmatprep.subr.bf16.mxu0 %v855
    %1428 = vmatpush1.bf16.msra.mxu0 %v854
    %1429 = vmatprep.subr.bf16.mxu0 %v859
    %1430 = vmatpush1.bf16.msra.mxu0 %v858
    %1431 = vmatprep.subr.bf16.mxu0 %v863
    %1432 = vmatpush1.bf16.msra.mxu0 %v862
    %1433 = vmatprep.subr.bf16.mxu0 %v867
    %1434 = vmatpush1.bf16.msra.mxu0 %v866
    %1435 = vmatprep.subr.bf16.mxu0 %v871
    %1436 = vmatpush1.bf16.msra.mxu0 %v870
    %1437 = vmatprep.subr.bf16.mxu0 %v875
    %1438 = vmatpush1.bf16.msra.mxu0 %v874
    %1439 = vmatprep.subr.bf16.mxu0 %v879
    %1440 = vmatpush1.bf16.msra.mxu0 %v878
    %1441 = vmatprep.subr.bf16.mxu0 %v883
    %1442 = vmatpush1.bf16.msra.mxu0 %v882
    %1443 = vmatprep.subr.bf16.mxu0 %v887
    %1444 = vmatpush1.bf16.msra.mxu0 %v886
    %1445 = vmatprep.subr.bf16.mxu0 %v891
    %1446 = vmatpush1.bf16.msra.mxu0 %v890
    %1447 = vmatprep.subr.bf16.mxu0 %v895
    %1448 = vmatpush1.bf16.msra.mxu0 %v894
    %1449 = vmatprep.subr.bf16.mxu0 %v899
    %1450 = vmatpush1.bf16.msra.mxu0 %v898
    %1451 = vmatprep.subr.bf16.mxu0 %v903
    %1452 = vmatpush1.bf16.msra.mxu0 %v902
    %1453 = vmatprep.subr.bf16.mxu0 %v907
    %1454 = vmatpush1.bf16.msra.mxu0 %v906
    %1455 = vmatprep.mubr.bf16.mxu0 %v1381
    %1456 = vmatmul.mubr.bf16.gmra.mrb[0].mxu0 %v1380
    %v1457 = vpop.f32.mrb[0].mxu0
    %v1458 = vadd.f32 %v1417, %v1457
    %v1459 = vpop.f32.mrb[0].mxu0
    %v1460 = vadd.f32 %v1419, %v1459
    %v1461 = vpop.f32.mrb[0].mxu0
    %v1462 = vpop.f32.mrb[0].mxu0
    %1463 = vdwg.mxu0
    %1464 = vmatprep.subr.bf16.mxu0 %v785
    %1465 = vmatpush1.bf16.msra.mxu0 %v784
    %1466 = vmatprep.subr.bf16.mxu0 %v789
    %1467 = vmatpush1.bf16.msra.mxu0 %v788
    %1468 = vmatprep.subr.bf16.mxu0 %v793
    %1469 = vmatpush1.bf16.msra.mxu0 %v792
    %1470 = vmatprep.subr.bf16.mxu0 %v797
    %1471 = vmatpush1.bf16.msra.mxu0 %v796
    %1472 = vmatprep.subr.bf16.mxu0 %v801
    %1473 = vmatpush1.bf16.msra.mxu0 %v800
    %1474 = vmatprep.subr.bf16.mxu0 %v805
    %1475 = vmatpush1.bf16.msra.mxu0 %v804
    %1476 = vmatprep.subr.bf16.mxu0 %v809
    %1477 = vmatpush1.bf16.msra.mxu0 %v808
    %1478 = vmatprep.subr.bf16.mxu0 %v813
    %1479 = vmatpush1.bf16.msra.mxu0 %v812
    %1480 = vmatprep.subr.bf16.mxu0 %v817
    %1481 = vmatpush1.bf16.msra.mxu0 %v816
    %1482 = vmatprep.subr.bf16.mxu0 %v821
    %1483 = vmatpush1.bf16.msra.mxu0 %v820
    %1484 = vmatprep.subr.bf16.mxu0 %v825
    %1485 = vmatpush1.bf16.msra.mxu0 %v824
    %1486 = vmatprep.subr.bf16.mxu0 %v829
    %1487 = vmatpush1.bf16.msra.mxu0 %v828
    %1488 = vmatprep.subr.bf16.mxu0 %v833
    %1489 = vmatpush1.bf16.msra.mxu0 %v832
    %1490 = vmatprep.subr.bf16.mxu0 %v837
    %1491 = vmatpush1.bf16.msra.mxu0 %v836
    %1492 = vmatprep.subr.bf16.mxu0 %v841
    %1493 = vmatpush1.bf16.msra.mxu0 %v840
    %1494 = vmatprep.subr.bf16.mxu0 %v845
    %1495 = vmatpush1.bf16.msra.mxu0 %v844
    %1496 = vmatprep.mubr.bf16.mxu0 %v1379
    %1497 = vmatmul.mubr.bf16.gmra.mrb[0].mxu0 %v1378
    %v1498 = vpop.f32.mrb[0].mxu0
    %v1499 = vadd.f32 %v389, %v1498
    %v1500 = vpop.f32.mrb[0].mxu0
    %v1501 = vadd.f32 %v393, %v1500
    %v1502 = vpop.f32.mrb[0].mxu0
    %v1503 = vpop.f32.mrb[0].mxu0
    %1504 = vdwg.mxu0
    %1505 = vmatprep.subr.bf16.mxu0 %v849
    %1506 = vmatpush1.bf16.msra.mxu0 %v848
    %1507 = vmatprep.subr.bf16.mxu0 %v853
    %1508 = vmatpush1.bf16.msra.mxu0 %v852
    %1509 = vmatprep.subr.bf16.mxu0 %v857
    %1510 = vmatpush1.bf16.msra.mxu0 %v856
    %1511 = vmatprep.subr.bf16.mxu0 %v861
    %1512 = vmatpush1.bf16.msra.mxu0 %v860
    %1513 = vmatprep.subr.bf16.mxu0 %v865
    %1514 = vmatpush1.bf16.msra.mxu0 %v864
    %1515 = vmatprep.subr.bf16.mxu0 %v869
    %1516 = vmatpush1.bf16.msra.mxu0 %v868
    %1517 = vmatprep.subr.bf16.mxu0 %v873
    %1518 = vmatpush1.bf16.msra.mxu0 %v872
    %1519 = vmatprep.subr.bf16.mxu0 %v877
    %1520 = vmatpush1.bf16.msra.mxu0 %v876
    %1521 = vmatprep.subr.bf16.mxu0 %v881
    %1522 = vmatpush1.bf16.msra.mxu0 %v880
    %1523 = vmatprep.subr.bf16.mxu0 %v885
    %1524 = vmatpush1.bf16.msra.mxu0 %v884
    %1525 = vmatprep.subr.bf16.mxu0 %v889
    %1526 = vmatpush1.bf16.msra.mxu0 %v888
    %1527 = vmatprep.subr.bf16.mxu0 %v893
    %1528 = vmatpush1.bf16.msra.mxu0 %v892
    %1529 = vmatprep.subr.bf16.mxu0 %v897
    %1530 = vmatpush1.bf16.msra.mxu0 %v896
    %1531 = vmatprep.subr.bf16.mxu0 %v901
    %1532 = vmatpush1.bf16.msra.mxu0 %v900
    %1533 = vmatprep.subr.bf16.mxu0 %v905
    %1534 = vmatpush1.bf16.msra.mxu0 %v904
    %1535 = vmatprep.subr.bf16.mxu0 %v909
    %1536 = vmatpush1.bf16.msra.mxu0 %v908
    %1537 = vmatprep.mubr.bf16.mxu0 %v1381
    %1538 = vmatmul.mubr.bf16.gmra.mrb[0].mxu0 %v1380
    %v1539 = vpop.f32.mrb[0].mxu0
    %v1540 = vadd.f32 %v1499, %v1539
    %v1541 = vpop.f32.mrb[0].mxu0
    %v1542 = vadd.f32 %v1501, %v1541
    %v1543 = vpop.f32.mrb[0].mxu0
    %v1544 = vpop.f32.mrb[0].mxu0
    %1545 = vdwg.mxu0
    %v1546 = vmax.f32 %v1458, 0.0
    %v1547 = vmax.f32 %v1460, 0.0
    %v1548 = vmax.f32 %v1540, 0.0
    %v1549 = vmax.f32 %v1542, 0.0
    %v1550 = vpack.c.bf16 %v1546, %v1546
    %v1551 = vpack.c.bf16 %v1547, %v1547
    %v1552 = vpack.c.bf16 %v1548, %v1548
    %v1553 = vpack.c.bf16 %v1549, %v1549
    %1554 = vmatprep.subr.bf16.mxu0 %v783
    %1555 = vmatpush1.bf16.msra.mxu0 %v782
    %1556 = vmatprep.subr.bf16.mxu0 %v787
    %1557 = vmatpush1.bf16.msra.mxu0 %v786
    %1558 = vmatprep.subr.bf16.mxu0 %v791
    %1559 = vmatpush1.bf16.msra.mxu0 %v790
    %1560 = vmatprep.subr.bf16.mxu0 %v795
    %1561 = vmatpush1.bf16.msra.mxu0 %v794
    %1562 = vmatprep.subr.bf16.mxu0 %v799
    %1563 = vmatpush1.bf16.msra.mxu0 %v798
    %1564 = vmatprep.subr.bf16.mxu0 %v803
    %1565 = vmatpush1.bf16.msra.mxu0 %v802
    %1566 = vmatprep.subr.bf16.mxu0 %v807
    %1567 = vmatpush1.bf16.msra.mxu0 %v806
    %1568 = vmatprep.subr.bf16.mxu0 %v811
    %1569 = vmatpush1.bf16.msra.mxu0 %v810
    %1570 = vmatprep.subr.bf16.mxu0 %v815
    %1571 = vmatpush1.bf16.msra.mxu0 %v814
    %1572 = vmatprep.subr.bf16.mxu0 %v819
    %1573 = vmatpush1.bf16.msra.mxu0 %v818
    %1574 = vmatprep.subr.bf16.mxu0 %v823
    %1575 = vmatpush1.bf16.msra.mxu0 %v822
    %1576 = vmatprep.subr.bf16.mxu0 %v827
    %1577 = vmatpush1.bf16.msra.mxu0 %v826
    %1578 = vmatprep.subr.bf16.mxu0 %v831
    %1579 = vmatpush1.bf16.msra.mxu0 %v830
    %1580 = vmatprep.subr.bf16.mxu0 %v835
    %1581 = vmatpush1.bf16.msra.mxu0 %v834
    %1582 = vmatprep.subr.bf16.mxu0 %v839
    %1583 = vmatpush1.bf16.msra.mxu0 %v838
    %1584 = vmatprep.subr.bf16.mxu0 %v843
    %1585 = vmatpush1.bf16.msra.mxu0 %v842
    %1586 = vmatprep.mubr.bf16.mxu0 %v1551
    %1587 = vmatmul.mubr.bf16.gmra.mrb[0].mxu0 %v1550
    %v1588 = vpop.f32.mrb[0].mxu0
    %v1589 = vadd.f32 %v381, %v1588
    %v1590 = vpop.f32.mrb[0].mxu0
    %v1591 = vadd.f32 %v385, %v1590
    %v1592 = vpop.f32.mrb[0].mxu0
    %v1593 = vpop.f32.mrb[0].mxu0
    %1594 = vdwg.mxu0
    %1595 = vmatprep.subr.bf16.mxu0 %v847
    %1596 = vmatpush1.bf16.msra.mxu0 %v846
    %1597 = vmatprep.subr.bf16.mxu0 %v851
    %1598 = vmatpush1.bf16.msra.mxu0 %v850
    %1599 = vmatprep.subr.bf16.mxu0 %v855
    %1600 = vmatpush1.bf16.msra.mxu0 %v854
    %1601 = vmatprep.subr.bf16.mxu0 %v859
    %1602 = vmatpush1.bf16.msra.mxu0 %v858
    %1603 = vmatprep.subr.bf16.mxu0 %v863
    %1604 = vmatpush1.bf16.msra.mxu0 %v862
    %1605 = vmatprep.subr.bf16.mxu0 %v867
    %1606 = vmatpush1.bf16.msra.mxu0 %v866
    %1607 = vmatprep.subr.bf16.mxu0 %v871
    %1608 = vmatpush1.bf16.msra.mxu0 %v870
    %1609 = vmatprep.subr.bf16.mxu0 %v875
    %1610 = vmatpush1.bf16.msra.mxu0 %v874
    %1611 = vmatprep.subr.bf16.mxu0 %v879
    %1612 = vmatpush1.bf16.msra.mxu0 %v878
    %1613 = vmatprep.subr.bf16.mxu0 %v883
    %1614 = vmatpush1.bf16.msra.mxu0 %v882
    %1615 = vmatprep.subr.bf16.mxu0 %v887
    %1616 = vmatpush1.bf16.msra.mxu0 %v886
    %1617 = vmatprep.subr.bf16.mxu0 %v891
    %1618 = vmatpush1.bf16.msra.mxu0 %v890
    %1619 = vmatprep.subr.bf16.mxu0 %v895
    %1620 = vmatpush1.bf16.msra.mxu0 %v894
    %1621 = vmatprep.subr.bf16.mxu0 %v899
    %1622 = vmatpush1.bf16.msra.mxu0 %v898
    %1623 = vmatprep.subr.bf16.mxu0 %v903
    %1624 = vmatpush1.bf16.msra.mxu0 %v902
    %1625 = vmatprep.subr.bf16.mxu0 %v907
    %1626 = vmatpush1.bf16.msra.mxu0 %v906
    %1627 = vmatprep.mubr.bf16.mxu0 %v1553
    %1628 = vmatmul.mubr.bf16.gmra.mrb[0].mxu0 %v1552
    %v1629 = vpop.f32.mrb[0].mxu0
    %v1630 = vadd.f32 %v1589, %v1629
    %v1631 = vpop.f32.mrb[0].mxu0
    %v1632 = vadd.f32 %v1591, %v1631
    %v1633 = vpop.f32.mrb[0].mxu0
    %v1634 = vpop.f32.mrb[0].mxu0
    %1635 = vdwg.mxu0
    %1636 = vmatprep.subr.bf16.mxu0 %v785
    %1637 = vmatpush1.bf16.msra.mxu0 %v784
    %1638 = vmatprep.subr.bf16.mxu0 %v789
    %1639 = vmatpush1.bf16.msra.mxu0 %v788
    %1640 = vmatprep.subr.bf16.mxu0 %v793
    %1641 = vmatpush1.bf16.msra.mxu0 %v792
    %1642 = vmatprep.subr.bf16.mxu0 %v797
    %1643 = vmatpush1.bf16.msra.mxu0 %v796
    %1644 = vmatprep.subr.bf16.mxu0 %v801
    %1645 = vmatpush1.bf16.msra.mxu0 %v800
    %1646 = vmatprep.subr.bf16.mxu0 %v805
    %1647 = vmatpush1.bf16.msra.mxu0 %v804
    %1648 = vmatprep.subr.bf16.mxu0 %v809
    %1649 = vmatpush1.bf16.msra.mxu0 %v808
    %1650 = vmatprep.subr.bf16.mxu0 %v813
    %1651 = vmatpush1.bf16.msra.mxu0 %v812
    %1652 = vmatprep.subr.bf16.mxu0 %v817
    %1653 = vmatpush1.bf16.msra.mxu0 %v816
    %1654 = vmatprep.subr.bf16.mxu0 %v821
    %1655 = vmatpush1.bf16.msra.mxu0 %v820
    %1656 = vmatprep.subr.bf16.mxu0 %v825
    %1657 = vmatpush1.bf16.msra.mxu0 %v824
    %1658 = vmatprep.subr.bf16.mxu0 %v829
    %1659 = vmatpush1.bf16.msra.mxu0 %v828
    %1660 = vmatprep.subr.bf16.mxu0 %v833
    %1661 = vmatpush1.bf16.msra.mxu0 %v832
    %1662 = vmatprep.subr.bf16.mxu0 %v837
    %1663 = vmatpush1.bf16.msra.mxu0 %v836
    %1664 = vmatprep.subr.bf16.mxu0 %v841
    %1665 = vmatpush1.bf16.msra.mxu0 %v840
    %1666 = vmatprep.subr.bf16.mxu0 %v845
    %1667 = vmatpush1.bf16.msra.mxu0 %v844
    %1668 = vmatprep.mubr.bf16.mxu0 %v1551
    %1669 = vmatmul.mubr.bf16.gmra.mrb[0].mxu0 %v1550
    %v1670 = vpop.f32.mrb[0].mxu0
    %v1671 = vadd.f32 %v389, %v1670
    %v1672 = vpop.f32.mrb[0].mxu0
    %v1673 = vadd.f32 %v393, %v1672
    %v1674 = vpop.f32.mrb[0].mxu0
    %v1675 = vpop.f32.mrb[0].mxu0
    %1676 = vdwg.mxu0
    %1677 = vmatprep.subr.bf16.mxu0 %v849
    %1678 = vmatpush1.bf16.msra.mxu0 %v848
    %1679 = vmatprep.subr.bf16.mxu0 %v853
    %1680 = vmatpush1.bf16.msra.mxu0 %v852
    %1681 = vmatprep.subr.bf16.mxu0 %v857
    %1682 = vmatpush1.bf16.msra.mxu0 %v856
    %1683 = vmatprep.subr.bf16.mxu0 %v861
    %1684 = vmatpush1.bf16.msra.mxu0 %v860
    %1685 = vmatprep.subr.bf16.mxu0 %v865
    %1686 = vmatpush1.bf16.msra.mxu0 %v864
    %1687 = vmatprep.subr.bf16.mxu0 %v869
    %1688 = vmatpush1.bf16.msra.mxu0 %v868
    %1689 = vmatprep.subr.bf16.mxu0 %v873
    %1690 = vmatpush1.bf16.msra.mxu0 %v872
    %1691 = vmatprep.subr.bf16.mxu0 %v877
    %1692 = vmatpush1.bf16.msra.mxu0 %v876
    %1693 = vmatprep.subr.bf16.mxu0 %v881
    %1694 = vmatpush1.bf16.msra.mxu0 %v880
    %1695 = vmatprep.subr.bf16.mxu0 %v885
    %1696 = vmatpush1.bf16.msra.mxu0 %v884
    %1697 = vmatprep.subr.bf16.mxu0 %v889
    %1698 = vmatpush1.bf16.msra.mxu0 %v888
    %1699 = vmatprep.subr.bf16.mxu0 %v893
    %1700 = vmatpush1.bf16.msra.mxu0 %v892
    %1701 = vmatprep.subr.bf16.mxu0 %v897
    %1702 = vmatpush1.bf16.msra.mxu0 %v896
    %1703 = vmatprep.subr.bf16.mxu0 %v901
    %1704 = vmatpush1.bf16.msra.mxu0 %v900
    %1705 = vmatprep.subr.bf16.mxu0 %v905
    %1706 = vmatpush1.bf16.msra.mxu0 %v904
    %1707 = vmatprep.subr.bf16.mxu0 %v909
    %1708 = vmatpush1.bf16.msra.mxu0 %v908
    %1709 = vmatprep.mubr.bf16.mxu0 %v1553
    %1710 = vmatmul.mubr.bf16.gmra.mrb[0].mxu0 %v1552
    %v1711 = vpop.f32.mrb[0].mxu0
    %v1712 = vadd.f32 %v1671, %v1711
    %v1713 = vpop.f32.mrb[0].mxu0
    %v1714 = vadd.f32 %v1673, %v1713
    %v1715 = vpop.f32.mrb[0].mxu0
    %v1716 = vpop.f32.mrb[0].mxu0
    %1717 = vdwg.mxu0
    %v1718 = vmax.f32 %v1630, 0.0
    %v1719 = vmax.f32 %v1632, 0.0
    %v1720 = vmax.f32 %v1712, 0.0
    %v1721 = vmax.f32 %v1714, 0.0
    %v1722 = vpack.c.bf16 %v1718, %v1718
    %v1723 = vpack.c.bf16 %v1719, %v1719
    %v1724 = vpack.c.bf16 %v1720, %v1720
    %v1725 = vpack.c.bf16 %v1721, %v1721
    %1726 = vmatprep.subr.bf16.mxu0 %v783
    %1727 = vmatpush1.bf16.msra.mxu0 %v782
    %1728 = vmatprep.subr.bf16.mxu0 %v787
    %1729 = vmatpush1.bf16.msra.mxu0 %v786
    %1730 = vmatprep.subr.bf16.mxu0 %v791
    %1731 = vmatpush1.bf16.msra.mxu0 %v790
    %1732 = vmatprep.subr.bf16.mxu0 %v795
    %1733 = vmatpush1.bf16.msra.mxu0 %v794
    %1734 = vmatprep.subr.bf16.mxu0 %v799
    %1735 = vmatpush1.bf16.msra.mxu0 %v798
    %1736 = vmatprep.subr.bf16.mxu0 %v803
    %1737 = vmatpush1.bf16.msra.mxu0 %v802
    %1738 = vmatprep.subr.bf16.mxu0 %v807
    %1739 = vmatpush1.bf16.msra.mxu0 %v806
    %1740 = vmatprep.subr.bf16.mxu0 %v811
    %1741 = vmatpush1.bf16.msra.mxu0 %v810
    %1742 = vmatprep.subr.bf16.mxu0 %v815
    %1743 = vmatpush1.bf16.msra.mxu0 %v814
    %1744 = vmatprep.subr.bf16.mxu0 %v819
    %1745 = vmatpush1.bf16.msra.mxu0 %v818
    %1746 = vmatprep.subr.bf16.mxu0 %v823
    %1747 = vmatpush1.bf16.msra.mxu0 %v822
    %1748 = vmatprep.subr.bf16.mxu0 %v827
    %1749 = vmatpush1.bf16.msra.mxu0 %v826
    %1750 = vmatprep.subr.bf16.mxu0 %v831
    %1751 = vmatpush1.bf16.msra.mxu0 %v830
    %1752 = vmatprep.subr.bf16.mxu0 %v835
    %1753 = vmatpush1.bf16.msra.mxu0 %v834
    %1754 = vmatprep.subr.bf16.mxu0 %v839
    %1755 = vmatpush1.bf16.msra.mxu0 %v838
    %1756 = vmatprep.subr.bf16.mxu0 %v843
    %1757 = vmatpush1.bf16.msra.mxu0 %v842
    %1758 = vmatprep.mubr.bf16.mxu0 %v1723
    %1759 = vmatmul.mubr.bf16.gmra.mrb[0].mxu0 %v1722
    %v1760 = vpop.f32.mrb[0].mxu0
    %v1761 = vadd.f32 %v381, %v1760
    %v1762 = vpop.f32.mrb[0].mxu0
    %v1763 = vadd.f32 %v385, %v1762
    %v1764 = vpop.f32.mrb[0].mxu0
    %v1765 = vpop.f32.mrb[0].mxu0
    %1766 = vdwg.mxu0
    %1767 = vmatprep.subr.bf16.mxu0 %v847
    %1768 = vmatpush1.bf16.msra.mxu0 %v846
    %1769 = vmatprep.subr.bf16.mxu0 %v851
    %1770 = vmatpush1.bf16.msra.mxu0 %v850
    %1771 = vmatprep.subr.bf16.mxu0 %v855
    %1772 = vmatpush1.bf16.msra.mxu0 %v854
    %1773 = vmatprep.subr.bf16.mxu0 %v859
    %1774 = vmatpush1.bf16.msra.mxu0 %v858
    %1775 = vmatprep.subr.bf16.mxu0 %v863
    %1776 = vmatpush1.bf16.msra.mxu0 %v862
    %1777 = vmatprep.subr.bf16.mxu0 %v867
    %1778 = vmatpush1.bf16.msra.mxu0 %v866
    %1779 = vmatprep.subr.bf16.mxu0 %v871
    %1780 = vmatpush1.bf16.msra.mxu0 %v870
    %1781 = vmatprep.subr.bf16.mxu0 %v875
    %1782 = vmatpush1.bf16.msra.mxu0 %v874
    %1783 = vmatprep.subr.bf16.mxu0 %v879
    %1784 = vmatpush1.bf16.msra.mxu0 %v878
    %1785 = vmatprep.subr.bf16.mxu0 %v883
    %1786 = vmatpush1.bf16.msra.mxu0 %v882
    %1787 = vmatprep.subr.bf16.mxu0 %v887
    %1788 = vmatpush1.bf16.msra.mxu0 %v886
    %1789 = vmatprep.subr.bf16.mxu0 %v891
    %1790 = vmatpush1.bf16.msra.mxu0 %v890
    %1791 = vmatprep.subr.bf16.mxu0 %v895
    %1792 = vmatpush1.bf16.msra.mxu0 %v894
    %1793 = vmatprep.subr.bf16.mxu0 %v899
    %1794 = vmatpush1.bf16.msra.mxu0 %v898
    %1795 = vmatprep.subr.bf16.mxu0 %v903
    %1796 = vmatpush1.bf16.msra.mxu0 %v902
    %1797 = vmatprep.subr.bf16.mxu0 %v907
    %1798 = vmatpush1.bf16.msra.mxu0 %v906
    %1799 = vmatprep.mubr.bf16.mxu0 %v1725
    %1800 = vmatmul.mubr.bf16.gmra.mrb[0].mxu0 %v1724
    %v1801 = vpop.f32.mrb[0].mxu0
    %v1802 = vadd.f32 %v1761, %v1801
    %v1803 = vpop.f32.mrb[0].mxu0
    %v1804 = vadd.f32 %v1763, %v1803
    %v1805 = vpop.f32.mrb[0].mxu0
    %v1806 = vpop.f32.mrb[0].mxu0
    %1807 = vdwg.mxu0
    %1808 = vmatprep.subr.bf16.mxu0 %v785
    %1809 = vmatpush1.bf16.msra.mxu0 %v784
    %1810 = vmatprep.subr.bf16.mxu0 %v789
    %1811 = vmatpush1.bf16.msra.mxu0 %v788
    %1812 = vmatprep.subr.bf16.mxu0 %v793
    %1813 = vmatpush1.bf16.msra.mxu0 %v792
    %1814 = vmatprep.subr.bf16.mxu0 %v797
    %1815 = vmatpush1.bf16.msra.mxu0 %v796
    %1816 = vmatprep.subr.bf16.mxu0 %v801
    %1817 = vmatpush1.bf16.msra.mxu0 %v800
    %1818 = vmatprep.subr.bf16.mxu0 %v805
    %1819 = vmatpush1.bf16.msra.mxu0 %v804
    %1820 = vmatprep.subr.bf16.mxu0 %v809
    %1821 = vmatpush1.bf16.msra.mxu0 %v808
    %1822 = vmatprep.subr.bf16.mxu0 %v813
    %1823 = vmatpush1.bf16.msra.mxu0 %v812
    %1824 = vmatprep.subr.bf16.mxu0 %v817
    %1825 = vmatpush1.bf16.msra.mxu0 %v816
    %1826 = vmatprep.subr.bf16.mxu0 %v821
    %1827 = vmatpush1.bf16.msra.mxu0 %v820
    %1828 = vmatprep.subr.bf16.mxu0 %v825
    %1829 = vmatpush1.bf16.msra.mxu0 %v824
    %1830 = vmatprep.subr.bf16.mxu0 %v829
    %1831 = vmatpush1.bf16.msra.mxu0 %v828
    %1832 = vmatprep.subr.bf16.mxu0 %v833
    %1833 = vmatpush1.bf16.msra.mxu0 %v832
    %1834 = vmatprep.subr.bf16.mxu0 %v837
    %1835 = vmatpush1.bf16.msra.mxu0 %v836
    %1836 = vmatprep.subr.bf16.mxu0 %v841
    %1837 = vmatpush1.bf16.msra.mxu0 %v840
    %1838 = vmatprep.subr.bf16.mxu0 %v845
    %1839 = vmatpush1.bf16.msra.mxu0 %v844
    %1840 = vmatprep.mubr.bf16.mxu0 %v1723
    %1841 = vmatmul.mubr.bf16.gmra.mrb[0].mxu0 %v1722
    %v1842 = vpop.f32.mrb[0].mxu0
    %v1843 = vadd.f32 %v389, %v1842
    %v1844 = vpop.f32.mrb[0].mxu0
    %v1845 = vadd.f32 %v393, %v1844
    %v1846 = vpop.f32.mrb[0].mxu0
    %v1847 = vpop.f32.mrb[0].mxu0
    %1848 = vdwg.mxu0
    %1849 = vmatprep.subr.bf16.mxu0 %v849
    %1850 = vmatpush1.bf16.msra.mxu0 %v848
    %1851 = vmatprep.subr.bf16.mxu0 %v853
    %1852 = vmatpush1.bf16.msra.mxu0 %v852
    %1853 = vmatprep.subr.bf16.mxu0 %v857
    %1854 = vmatpush1.bf16.msra.mxu0 %v856
    %1855 = vmatprep.subr.bf16.mxu0 %v861
    %1856 = vmatpush1.bf16.msra.mxu0 %v860
    %1857 = vmatprep.subr.bf16.mxu0 %v865
    %1858 = vmatpush1.bf16.msra.mxu0 %v864
    %1859 = vmatprep.subr.bf16.mxu0 %v869
    %1860 = vmatpush1.bf16.msra.mxu0 %v868
    %1861 = vmatprep.subr.bf16.mxu0 %v873
    %1862 = vmatpush1.bf16.msra.mxu0 %v872
    %1863 = vmatprep.subr.bf16.mxu0 %v877
    %1864 = vmatpush1.bf16.msra.mxu0 %v876
    %1865 = vmatprep.subr.bf16.mxu0 %v881
    %1866 = vmatpush1.bf16.msra.mxu0 %v880
    %1867 = vmatprep.subr.bf16.mxu0 %v885
    %1868 = vmatpush1.bf16.msra.mxu0 %v884
    %1869 = vmatprep.subr.bf16.mxu0 %v889
    %1870 = vmatpush1.bf16.msra.mxu0 %v888
    %1871 = vmatprep.subr.bf16.mxu0 %v893
    %1872 = vmatpush1.bf16.msra.mxu0 %v892
    %1873 = vmatprep.subr.bf16.mxu0 %v897
    %1874 = vmatpush1.bf16.msra.mxu0 %v896
    %1875 = vmatprep.subr.bf16.mxu0 %v901
    %1876 = vmatpush1.bf16.msra.mxu0 %v900
    %1877 = vmatprep.subr.bf16.mxu0 %v905
    %1878 = vmatpush1.bf16.msra.mxu0 %v904
    %1879 = vmatprep.subr.bf16.mxu0 %v909
    %1880 = vmatpush1.bf16.msra.mxu0 %v908
    %1881 = vmatprep.mubr.bf16.mxu0 %v1725
    %1882 = vmatmul.mubr.bf16.gmra.mrb[0].mxu0 %v1724
    %v1883 = vpop.f32.mrb[0].mxu0
    %v1884 = vadd.f32 %v1843, %v1883
    %v1885 = vpop.f32.mrb[0].mxu0
    %v1886 = vadd.f32 %v1845, %v1885
    %v1887 = vpop.f32.mrb[0].mxu0
    %v1888 = vpop.f32.mrb[0].mxu0
    %1889 = vdwg.mxu0
    %v1890 = vmax.f32 %v1802, 0.0
    %v1891 = vmax.f32 %v1804, 0.0
    %v1892 = vmax.f32 %v1884, 0.0
    %v1893 = vmax.f32 %v1886, 0.0
    %v1894 = vpack.c.bf16 %v1890, %v1890
    %v1895 = vpack.c.bf16 %v1891, %v1891
    %v1896 = vpack.c.bf16 %v1892, %v1892
    %v1897 = vpack.c.bf16 %v1893, %v1893
    %v1898 = vld [vmem:[#allocation8] sm:$0xf]
    %v1899 = vld [vmem:[#allocation8 + $0x4] sm:$0xf]
    %v1900 = vld [vmem:[#allocation8 + $0x8] sm:$0xf]
    %v1901 = vld [vmem:[#allocation8 + $0xc] sm:$0xf]
    %v1902 = vld [vmem:[#allocation8 + $0x10] sm:$0xf]
    %v1903 = vld [vmem:[#allocation8 + $0x14] sm:$0xf]
    %v1904 = vld [vmem:[#allocation8 + $0x18] sm:$0xf]
    %v1905 = vld [vmem:[#allocation8 + $0x1c] sm:$0xf]
    %v1906 = vld [vmem:[#allocation8 + $0x20] sm:$0xf]
    %v1907 = vld [vmem:[#allocation8 + $0x24] sm:$0xf]
    %v1908 = vld [vmem:[#allocation8 + $0x28] sm:$0xf]
    %v1909 = vld [vmem:[#allocation8 + $0x2c] sm:$0xf]
    %v1910 = vld [vmem:[#allocation8 + $0x30] sm:$0xf]
    %v1911 = vld [vmem:[#allocation8 + $0x34] sm:$0xf]
    %v1912 = vld [vmem:[#allocation8 + $0x38] sm:$0xf]
    %v1913 = vld [vmem:[#allocation8 + $0x3c] sm:$0xf]
    %v1914 = vld [vmem:[#allocation8 + $0x40] sm:$0xf]
    %v1915 = vld [vmem:[#allocation8 + $0x44] sm:$0xf]
    %v1916 = vld [vmem:[#allocation8 + $0x48] sm:$0xf]
    %v1917 = vld [vmem:[#allocation8 + $0x4c] sm:$0xf]
    %v1918 = vld [vmem:[#allocation8 + $0x50] sm:$0xf]
    %v1919 = vld [vmem:[#allocation8 + $0x54] sm:$0xf]
    %v1920 = vld [vmem:[#allocation8 + $0x58] sm:$0xf]
    %v1921 = vld [vmem:[#allocation8 + $0x5c] sm:$0xf]
    %v1922 = vld [vmem:[#allocation8 + $0x60] sm:$0xf]
    %v1923 = vld [vmem:[#allocation8 + $0x64] sm:$0xf]
    %v1924 = vld [vmem:[#allocation8 + $0x68] sm:$0xf]
    %v1925 = vld [vmem:[#allocation8 + $0x6c] sm:$0xf]
    %v1926 = vld [vmem:[#allocation8 + $0x70] sm:$0xf]
    %v1927 = vld [vmem:[#allocation8 + $0x74] sm:$0xf]
    %v1928 = vld [vmem:[#allocation8 + $0x78] sm:$0xf]
    %v1929 = vld [vmem:[#allocation8 + $0x7c] sm:$0xf]
    %v1930 = vld [vmem:[#allocation8 + $0x80] sm:$0xf]
    %v1931 = vld [vmem:[#allocation8 + $0x84] sm:$0xf]
    %v1932 = vld [vmem:[#allocation8 + $0x88] sm:$0xf]
    %v1933 = vld [vmem:[#allocation8 + $0x8c] sm:$0xf]
    %v1934 = vld [vmem:[#allocation8 + $0x90] sm:$0xf]
    %v1935 = vld [vmem:[#allocation8 + $0x94] sm:$0xf]
    %v1936 = vld [vmem:[#allocation8 + $0x98] sm:$0xf]
    %v1937 = vld [vmem:[#allocation8 + $0x9c] sm:$0xf]
    %v1938 = vld [vmem:[#allocation8 + $0xa0] sm:$0xf]
    %v1939 = vld [vmem:[#allocation8 + $0xa4] sm:$0xf]
    %v1940 = vld [vmem:[#allocation8 + $0xa8] sm:$0xf]
    %v1941 = vld [vmem:[#allocation8 + $0xac] sm:$0xf]
    %v1942 = vld [vmem:[#allocation8 + $0xb0] sm:$0xf]
    %v1943 = vld [vmem:[#allocation8 + $0xb4] sm:$0xf]
    %v1944 = vld [vmem:[#allocation8 + $0xb8] sm:$0xf]
    %v1945 = vld [vmem:[#allocation8 + $0xbc] sm:$0xf]
    %v1946 = vld [vmem:[#allocation8 + $0xc0] sm:$0xf]
    %v1947 = vld [vmem:[#allocation8 + $0xc4] sm:$0xf]
    %v1948 = vld [vmem:[#allocation8 + $0xc8] sm:$0xf]
    %v1949 = vld [vmem:[#allocation8 + $0xcc] sm:$0xf]
    %v1950 = vld [vmem:[#allocation8 + $0xd0] sm:$0xf]
    %v1951 = vld [vmem:[#allocation8 + $0xd4] sm:$0xf]
    %v1952 = vld [vmem:[#allocation8 + $0xd8] sm:$0xf]
    %v1953 = vld [vmem:[#allocation8 + $0xdc] sm:$0xf]
    %v1954 = vld [vmem:[#allocation8 + $0xe0] sm:$0xf]
    %v1955 = vld [vmem:[#allocation8 + $0xe4] sm:$0xf]
    %v1956 = vld [vmem:[#allocation8 + $0xe8] sm:$0xf]
    %v1957 = vld [vmem:[#allocation8 + $0xec] sm:$0xf]
    %v1958 = vld [vmem:[#allocation8 + $0xf0] sm:$0xf]
    %v1959 = vld [vmem:[#allocation8 + $0xf4] sm:$0xf]
    %v1960 = vld [vmem:[#allocation8 + $0xf8] sm:$0xf]
    %v1961 = vld [vmem:[#allocation8 + $0xfc] sm:$0xf]
    %v1963 = vlaneseq
    %v1964 = vshrl.u32 %v1963, 7
    %v1965 = vsub.s32 0, %v1964
    %v1966 = vrot.slane %v83, %v1965
    %v2032 = vunpack.c.l.b16 %v1898
    %v2033 = vunpack.c.l.b16 %v1899
    %v2034 = vunpack.c.l.b16 %v1900
    %v2035 = vunpack.c.l.b16 %v1901
    %v2036 = vunpack.c.l.b16 %v1902
    %v2037 = vunpack.c.l.b16 %v1903
    %v2038 = vunpack.c.l.b16 %v1904
    %v2039 = vunpack.c.l.b16 %v1905
    %v2040 = vunpack.c.l.b16 %v1906
    %v2041 = vunpack.c.l.b16 %v1907
    %v2042 = vunpack.c.l.b16 %v1908
    %v2043 = vunpack.c.l.b16 %v1909
    %v2044 = vunpack.c.l.b16 %v1910
    %v2045 = vunpack.c.l.b16 %v1911
    %v2046 = vunpack.c.l.b16 %v1912
    %v2047 = vunpack.c.l.b16 %v1913
    %v2048 = vunpack.c.l.b16 %v1914
    %v2049 = vunpack.c.l.b16 %v1915
    %v2050 = vunpack.c.l.b16 %v1916
    %v2051 = vunpack.c.l.b16 %v1917
    %v2052 = vunpack.c.l.b16 %v1918
    %v2053 = vunpack.c.l.b16 %v1919
    %v2054 = vunpack.c.l.b16 %v1920
    %v2055 = vunpack.c.l.b16 %v1921
    %v2056 = vunpack.c.l.b16 %v1922
    %v2057 = vunpack.c.l.b16 %v1923
    %v2058 = vunpack.c.l.b16 %v1924
    %v2059 = vunpack.c.l.b16 %v1925
    %v2060 = vunpack.c.l.b16 %v1926
    %v2061 = vunpack.c.l.b16 %v1927
    %v2062 = vunpack.c.l.b16 %v1928
    %v2063 = vunpack.c.l.b16 %v1929
    %v2064 = vunpack.c.l.b16 %v1930
    %v2065 = vunpack.c.l.b16 %v1931
    %v2066 = vunpack.c.l.b16 %v1932
    %v2067 = vunpack.c.l.b16 %v1933
    %v2068 = vunpack.c.l.b16 %v1934
    %v2069 = vunpack.c.l.b16 %v1935
    %v2070 = vunpack.c.l.b16 %v1936
    %v2071 = vunpack.c.l.b16 %v1937
    %v2072 = vunpack.c.l.b16 %v1938
    %v2073 = vunpack.c.l.b16 %v1939
    %v2074 = vunpack.c.l.b16 %v1940
    %v2075 = vunpack.c.l.b16 %v1941
    %v2076 = vunpack.c.l.b16 %v1942
    %v2077 = vunpack.c.l.b16 %v1943
    %v2078 = vunpack.c.l.b16 %v1944
    %v2079 = vunpack.c.l.b16 %v1945
    %v2080 = vunpack.c.l.b16 %v1946
    %v2081 = vunpack.c.l.b16 %v1947
    %v2082 = vunpack.c.l.b16 %v1948
    %v2083 = vunpack.c.l.b16 %v1949
    %v2084 = vunpack.c.l.b16 %v1950
    %v2085 = vunpack.c.l.b16 %v1951
    %v2086 = vunpack.c.l.b16 %v1952
    %v2087 = vunpack.c.l.b16 %v1953
    %v2088 = vunpack.c.l.b16 %v1954
    %v2089 = vunpack.c.l.b16 %v1955
    %v2090 = vunpack.c.l.b16 %v1956
    %v2091 = vunpack.c.l.b16 %v1957
    %v2092 = vunpack.c.l.b16 %v1958
    %v2093 = vunpack.c.l.b16 %v1959
    %v2094 = vunpack.c.l.b16 %v1960
    %v2095 = vunpack.c.l.b16 %v1961
    %v2096 = vpack.c.b16 %v2033, %v2032
    %v2097 = vpack.c.b16 %v2035, %v2034
    %v2098 = vpack.c.b16 %v2037, %v2036
    %v2099 = vpack.c.b16 %v2039, %v2038
    %v2100 = vpack.c.b16 %v2041, %v2040
    %v2101 = vpack.c.b16 %v2043, %v2042
    %v2102 = vpack.c.b16 %v2045, %v2044
    %v2103 = vpack.c.b16 %v2047, %v2046
    %v2104 = vpack.c.b16 %v2049, %v2048
    %v2105 = vpack.c.b16 %v2051, %v2050
    %v2106 = vpack.c.b16 %v2053, %v2052
    %v2107 = vpack.c.b16 %v2055, %v2054
    %v2108 = vpack.c.b16 %v2057, %v2056
    %v2109 = vpack.c.b16 %v2059, %v2058
    %v2110 = vpack.c.b16 %v2061, %v2060
    %v2111 = vpack.c.b16 %v2063, %v2062
    %v2112 = vpack.c.b16 %v2065, %v2064
    %v2113 = vpack.c.b16 %v2067, %v2066
    %v2114 = vpack.c.b16 %v2069, %v2068
    %v2115 = vpack.c.b16 %v2071, %v2070
    %v2116 = vpack.c.b16 %v2073, %v2072
    %v2117 = vpack.c.b16 %v2075, %v2074
    %v2118 = vpack.c.b16 %v2077, %v2076
    %v2119 = vpack.c.b16 %v2079, %v2078
    %v2120 = vpack.c.b16 %v2081, %v2080
    %v2121 = vpack.c.b16 %v2083, %v2082
    %v2122 = vpack.c.b16 %v2085, %v2084
    %v2123 = vpack.c.b16 %v2087, %v2086
    %v2124 = vpack.c.b16 %v2089, %v2088
    %v2125 = vpack.c.b16 %v2091, %v2090
    %v2126 = vpack.c.b16 %v2093, %v2092
    %v2127 = vpack.c.b16 %v2095, %v2094
    %2160 = vmatprep.subr.bf16.mxu0 0
    %2161 = vmatpush1.bf16.msra.mxu0 %v2096
    %2162 = vmatprep.subr.bf16.mxu0 0
    %2163 = vmatpush1.bf16.msra.mxu0 %v2097
    %2164 = vmatprep.subr.bf16.mxu0 0
    %2165 = vmatpush1.bf16.msra.mxu0 %v2098
    %2166 = vmatprep.subr.bf16.mxu0 0
    %2167 = vmatpush1.bf16.msra.mxu0 %v2099
    %2168 = vmatprep.subr.bf16.mxu0 0
    %2169 = vmatpush1.bf16.msra.mxu0 %v2100
    %2170 = vmatprep.subr.bf16.mxu0 0
    %2171 = vmatpush1.bf16.msra.mxu0 %v2101
    %2172 = vmatprep.subr.bf16.mxu0 0
    %2173 = vmatpush1.bf16.msra.mxu0 %v2102
    %2174 = vmatprep.subr.bf16.mxu0 0
    %2175 = vmatpush1.bf16.msra.mxu0 %v2103
    %2176 = vmatprep.subr.bf16.mxu0 0
    %2177 = vmatpush1.bf16.msra.mxu0 %v2104
    %2178 = vmatprep.subr.bf16.mxu0 0
    %2179 = vmatpush1.bf16.msra.mxu0 %v2105
    %2180 = vmatprep.subr.bf16.mxu0 0
    %2181 = vmatpush1.bf16.msra.mxu0 %v2106
    %2182 = vmatprep.subr.bf16.mxu0 0
    %2183 = vmatpush1.bf16.msra.mxu0 %v2107
    %2184 = vmatprep.subr.bf16.mxu0 0
    %2185 = vmatpush1.bf16.msra.mxu0 %v2108
    %2186 = vmatprep.subr.bf16.mxu0 0
    %2187 = vmatpush1.bf16.msra.mxu0 %v2109
    %2188 = vmatprep.subr.bf16.mxu0 0
    %2189 = vmatpush1.bf16.msra.mxu0 %v2110
    %2190 = vmatprep.subr.bf16.mxu0 0
    %2191 = vmatpush1.bf16.msra.mxu0 %v2111
    %2192 = vmatprep.mubr.bf16.mxu0 %v1895
    %2193 = vmatmul.mubr.bf16.gmra.mrb[0].mxu0 %v1894
    %v2194 = vpop.f32.mrb[0].mxu0
    %v2195 = vadd.f32 %v1966, %v2194
    %v2196 = vpop.f32.mrb[0].mxu0
    %v2197 = vpop.f32.mrb[0].mxu0
    %v2198 = vpop.f32.mrb[0].mxu0
    %2199 = vdwg.mxu0
    %2200 = vmatprep.subr.bf16.mxu0 0
    %2201 = vmatpush1.bf16.msra.mxu0 %v2112
    %2202 = vmatprep.subr.bf16.mxu0 0
    %2203 = vmatpush1.bf16.msra.mxu0 %v2113
    %2204 = vmatprep.subr.bf16.mxu0 0
    %2205 = vmatpush1.bf16.msra.mxu0 %v2114
    %2206 = vmatprep.subr.bf16.mxu0 0
    %2207 = vmatpush1.bf16.msra.mxu0 %v2115
    %2208 = vmatprep.subr.bf16.mxu0 0
    %2209 = vmatpush1.bf16.msra.mxu0 %v2116
    %2210 = vmatprep.subr.bf16.mxu0 0
    %2211 = vmatpush1.bf16.msra.mxu0 %v2117
    %2212 = vmatprep.subr.bf16.mxu0 0
    %2213 = vmatpush1.bf16.msra.mxu0 %v2118
    %2214 = vmatprep.subr.bf16.mxu0 0
    %2215 = vmatpush1.bf16.msra.mxu0 %v2119
    %2216 = vmatprep.subr.bf16.mxu0 0
    %2217 = vmatpush1.bf16.msra.mxu0 %v2120
    %2218 = vmatprep.subr.bf16.mxu0 0
    %2219 = vmatpush1.bf16.msra.mxu0 %v2121
    %2220 = vmatprep.subr.bf16.mxu0 0
    %2221 = vmatpush1.bf16.msra.mxu0 %v2122
    %2222 = vmatprep.subr.bf16.mxu0 0
    %2223 = vmatpush1.bf16.msra.mxu0 %v2123
    %2224 = vmatprep.subr.bf16.mxu0 0
    %2225 = vmatpush1.bf16.msra.mxu0 %v2124
    %2226 = vmatprep.subr.bf16.mxu0 0
    %2227 = vmatpush1.bf16.msra.mxu0 %v2125
    %2228 = vmatprep.subr.bf16.mxu0 0
    %2229 = vmatpush1.bf16.msra.mxu0 %v2126
    %2230 = vmatprep.subr.bf16.mxu0 0
    %2231 = vmatpush1.bf16.msra.mxu0 %v2127
    %2232 = vmatprep.mubr.bf16.mxu0 %v1897
    %2233 = vmatmul.mubr.bf16.gmra.mrb[0].mxu0 %v1896
    %v2234 = vpop.f32.mrb[0].mxu0
    %v2235 = vadd.f32 %v2195, %v2234
    %v2236 = vpop.f32.mrb[0].mxu0
    %v2237 = vpop.f32.mrb[0].mxu0
    %v2238 = vpop.f32.mrb[0].mxu0
    %2239 = vdwg.mxu0
    %v2240 = vmax.f32 %v2235, 0.0
    %2241 = vst [vmem:[#allocation10] sm:$0xff] %v2240
    // Predicated region
    $region46: #{mlp1_forward.1} parent=1 // pred_check
      _
    $region47: #{mlp1_forward.1} parent=1 // pred_check_branch
      %2243 = sbr.rel (0) target = $region49
    $region48: #{mlp1_forward.1} parent=1 // pred_region
      %s2245 = ssub.s32 128, 128
      %2246 = vsyncadd [#allocation4], %s2245
      %s2248 = sshll.u32 [#allocation10], 4
      %s2249 = int_to_ptr.vmem [resolvable:$true] %s2248
      %2251 = dma.vmem_to_hbm [thread:$0]  %s2249, 128, %s7, [#allocation4]
    $region49: #{mlp1_forward.1} parent=1 // pred_fallthru
      _
    // Predicated region
    $region50: #{mlp1_forward.1} parent=1 // pred_check
      _
    $region51: #{mlp1_forward.1} parent=1 // pred_check_branch
      %2253 = sbr.rel (0) target = $region53
    $region52: #{mlp1_forward.1} parent=1 // pred_region
      %2254 = dma.done [#allocation4], 128
    $region53: #{mlp1_forward.1} parent=1 // pred_fallthru
      _
    %2255 = vsyncpa [#allocation3], 1
    %2256 = vsyncpa [#allocation6], 1
    %2257 = vsyncpa [#allocation9], 1
    %2258 = vsyncpa [#allocation4], 1

</llo_original>
